<compile_context>
chip_gen: v7x
topology: tpu7x:2x2x1
jax: 0.10.0
libtpu: 0.0.40
codegen_flags: <defaults>
</compile_context>

<pallas_src>
import functools

import jax
import jax.numpy as jnp
from jax import lax
from jax.experimental import pallas as pl
from jax.experimental.pallas import tpu as pltpu


# VMEM cap: fits v7x's 64 MiB physical VMEM with headroom; per-step usage here is <1 MiB,
# so the same value is fine on v5e/v6e (raise it there only when row-tiling huge images).
_VMEM_LIMIT = 48 * 1024 * 1024


# ------------------- fused conv + bias + LeakyReLU + BN-statistics kernel ------------------- #

def _conv_lrelu_bnstats_kernel(x_ref, w_ref, b_ref, y_ref, st_ref, *, kh, h_out):
    """One batch element of a stride-1 conv in lane-flat (row, w*c) form.

    x_ref : (1, h_out + kh - 1, (w_out + kw - 1) * Cin)  bf16  zero-padded, lane-flat rows
    w_ref : (kh, (w_out + kw - 1) * Cin, w_out * Cout)   bf16  banded weights (kw, W folded in)
    b_ref : (1, w_out * Cout)                            f32   per-lane (tiled) bias
    y_ref : (1, h_out, w_out * Cout)                           conv + bias + LeakyReLU output
    st_ref: (1, 2, w_out * Cout)                         f32   per-lane [sum, sum_of_squares]
    """
    # kh wide-K MXU matmuls (K = full padded row width); the only data movement is a
    # cheap row-offset slice per dh -- no per-tap lane slices, reshapes or concats.
    acc = jnp.dot(x_ref[0, 0:h_out, :], w_ref[0], preferred_element_type=jnp.float32)
    for dh in range(1, kh):
        acc = acc + jnp.dot(x_ref[0, dh:dh + h_out, :], w_ref[dh],
                            preferred_element_type=jnp.float32)

    acc = acc + b_ref[...]
    acc = jnp.where(acc >= 0.0, acc, 0.01 * acc)            # LeakyReLU(0.01), f32

    # Lane-dense store (w_out*Cout lanes = 128 / 64 here), fp32 acc fits in 2 vregs.
    y_ref[...] = acc.reshape(y_ref.shape).astype(y_ref.dtype)

    # BatchNorm batch-statistics partials (per lane; wrapper folds lanes -> channels).
    s = jnp.sum(acc, axis=0, keepdims=True)
    ss = jnp.sum(acc * acc, axis=0, keepdims=True)
    st_ref[...] = jnp.concatenate([s, ss], axis=0).reshape(st_ref.shape)


def conv_lrelu_bnstats(x_flat, w_banded, b_tiled, *, h_out, out_dtype):
    """Fused conv (banded-matmul form) + bias + LeakyReLU + BN statistics.

    x_flat   : (N, h_out + kh - 1, (w_out + kw - 1) * Cin)  bf16, already zero padded
    w_banded : (kh, (w_out + kw - 1) * Cin, w_out * Cout)   bf16
    b_tiled  : (1, w_out * Cout)                            f32
    Returns y: (N, h_out, w_out*Cout) out_dtype and stats: (N, 2, w_out*Cout) f32.
    """
    n, h_in, p_in = x_flat.shape
    kh, p_in2, wc_out = w_banded.shape
    assert p_in == p_in2 and h_in == h_out + kh - 1, (x_flat.shape, w_banded.shape, h_out)

    # grid=(batch,): full-image blocks are the largest tiles these shapes allow (per-step
    # overhead dominated otherwise); for big images tile rows so N*blocks >= 4 on v7x.
    return pl.pallas_call(
        functools.partial(_conv_lrelu_bnstats_kernel, kh=kh, h_out=h_out),
        out_shape=(
            jax.ShapeDtypeStruct((n, h_out, wc_out), out_dtype),
            jax.ShapeDtypeStruct((n, 2, wc_out), jnp.float32),
        ),
        grid=(n,),
        in_specs=[
            pl.BlockSpec((1, h_in, p_in), lambda b: (b, 0, 0)),
            pl.BlockSpec((kh, p_in, wc_out), lambda b: (0, 0, 0)),   # constant block: fetched once
            pl.BlockSpec((1, wc_out), lambda b: (0, 0)),
        ],
        out_specs=(
            pl.BlockSpec((1, h_out, wc_out), lambda b: (b, 0, 0)),
            pl.BlockSpec((1, 2, wc_out), lambda b: (b, 0, 0)),
        ),
        compiler_params=pltpu.CompilerParams(
            dimension_semantics=("parallel",),
            vmem_limit_bytes=_VMEM_LIMIT,
        ),
    )(x_flat, w_banded, b_tiled)


# ---------------------------------------- weight prep --------------------------------------- #

def _conv_taps(w_oihw):
    """PyTorch OIHW (Cout, Cin, kh, kw) -> tap-major (kh, kw, Cin, Cout)."""
    return jnp.transpose(w_oihw, (2, 3, 1, 0))


def _s2d_taps(w_oihw):
    """Stride-2 3x3 OIHW weights -> equivalent stride-1 2x2 taps over a 2x2 space-to-depth
    input: (2, 2, 4*Cin, Cout), s2d channel order (ph, pw, cin)."""
    c_out, c_in = w_oihw.shape[0], w_oihw.shape[1]
    wt = _conv_taps(w_oihw)                                     # (3, 3, cin, cout)
    w4 = jnp.zeros((2, 2, 2, 2, c_in, c_out), w_oihw.dtype)     # [dr, dc, ph, pw, cin, cout]
    for k_h in range(3):
        for k_w in range(3):
            dr, ph = divmod(k_h, 2)
            dc, pw = divmod(k_w, 2)
            w4 = w4.at[dr, dc, ph, pw].set(wt[k_h, k_w])
    return w4.reshape(2, 2, 4 * c_in, c_out)


def _banded_weight(w_taps, w_out):
    """(kh, kw, Cin, Cout) taps -> (kh, (w_out+kw-1)*Cin, w_out*Cout) banded matrices with
    mats[dh, (w+dw)*Cin + ci, w*Cout + co] == w_taps[dh, dw, ci, co], so one matmul of the
    lane-flat padded input rows against mats[dh] evaluates every kw tap of every output
    column at once (built once outside the kernel; mostly-zero MXU fill is free here)."""
    kh, kw, cin, cout = w_taps.shape
    eye = jnp.eye(w_out, dtype=w_taps.dtype)
    mats = []
    for dh in range(kh):
        m = jnp.zeros(((w_out + kw - 1) * cin, w_out * cout), w_taps.dtype)
        for dw in range(kw):
            blk = jnp.einsum("io,uv->uivo", w_taps[dh, dw], eye)
            blk = blk.reshape(w_out * cin, w_out * cout)
            m = m + jnp.pad(blk, ((dw * cin, (kw - 1 - dw) * cin), (0, 0)))
        mats.append(m)
    return jnp.stack(mats, axis=0)


# ---------------------------------------- forward pass -------------------------------------- #

@jax.jit
def strided_block_forward(x_nchw, params):
    """stridedBlock forward (training-mode BatchNorm, eps=1e-5), NCHW in / NCHW out."""
    x = jnp.transpose(x_nchw, (0, 2, 3, 1)).astype(jnp.float32)       # NHWC
    n, h, w, c_in = x.shape
    c = params["w1"].shape[0]
    assert h % 2 == 0 and w % 2 == 0
    h2, w2 = h // 2, w // 2

    # ---- stage 1: Conv3x3 s1 p1 + bias + LeakyReLU + BN1 statistics, one fused kernel ----
    xp = jnp.pad(x, ((0, 0), (1, 1), (1, 1), (0, 0)))                 # zero pad
    x_flat = xp.reshape(n, h + 2, (w + 2) * c_in).astype(jnp.bfloat16)
    w1_banded = _banded_weight(_conv_taps(params["w1"]), w).astype(jnp.bfloat16)
    b1_tiled = jnp.tile(params["b1"].astype(jnp.float32), w)[None]    # (1, W*C)
    y, st1 = conv_lrelu_bnstats(x_flat, w1_banded, b1_tiled, h_out=h,
                                out_dtype=jnp.bfloat16)               # y: (N, H, W*C) bf16

    s1 = jnp.sum(st1.reshape(n, 2, w, c), axis=(0, 2))                # (2, C) tiny reduction
    cnt1 = n * h * w
    mean1 = s1[0] / cnt1
    # NOTE: E[x^2]-E[x]^2 in f32; fine at these magnitudes, use a centered/Welford variant
    # if activation means grow large.
    var1 = s1[1] / cnt1 - mean1 * mean1                               # biased var (PyTorch BN)
    scale1 = params["g1"] * lax.rsqrt(var1 + 1e-5)
    shift1 = params["be1"] - mean1 * scale1

    # ---- BN1 affine + zero pad + 2x2 space-to-depth, all materialized in bf16 ----
    # Affine evaluated in f32 registers, stored straight to bf16: no f32 inter-stage tensor.
    yn = (y.astype(jnp.float32) * jnp.tile(scale1, w) + jnp.tile(shift1, w)).astype(jnp.bfloat16)
    ynp = jnp.pad(yn.reshape(n, h, w, c), ((0, 0), (1, 1), (1, 1), (0, 0)))
    hs, ws = (h + 2) // 2, (w + 2) // 2
    ysd = (ynp.reshape(n, hs, 2, ws, 2, c)
              .transpose(0, 1, 3, 2, 4, 5)
              .reshape(n, hs, ws * 4 * c))                            # (N, hs, ws*4C) bf16

    # ---- stage 2: Conv3x3 s2 p1 as a stride-1 2x2 conv over the s2d input, fused as above ----
    w2_banded = _banded_weight(_s2d_taps(params["w2"]), w2).astype(jnp.bfloat16)
    b2_tiled = jnp.tile(params["b2"].astype(jnp.float32), w2)[None]   # (1, W2*C)
    z, st2 = conv_lrelu_bnstats(ysd, w2_banded, b2_tiled, h_out=h2,
                                out_dtype=jnp.float32)                # z: (N, H2, W2*C) f32

    s2 = jnp.sum(st2.reshape(n, 2, w2, c), axis=(0, 2))
    cnt2 = n * h2 * w2
    mean2 = s2[0] / cnt2
    var2 = s2[1] / cnt2 - mean2 * mean2
    scale2 = params["g2"] * lax.rsqrt(var2 + 1e-5)
    shift2 = params["be2"] - mean2 * scale2

    # ---- BN2 affine in plain jnp: XLA fuses it into the final NCHW transpose (no extra pass) ----
    zn = z.reshape(n, h2, w2, c) * scale2 + shift2
    return jnp.transpose(zn, (0, 3, 1, 2))                            # NCHW


# -------------------------------------- pure-JAX reference ---------------------------------- #

def _ref_forward(x, p):
    def conv(x, w, b, stride):
        y = lax.conv_general_dilated(
            x, w, (stride, stride), [(1, 1), (1, 1)],
            dimension_numbers=("NCHW", "OIHW", "NCHW"))
        return y + b[None, :, None, None]

    def bn(y, g, be):
        m = jnp.mean(y, axis=(0, 2, 3), keepdims=True)
        v = jnp.mean((y - m) ** 2, axis=(0, 2, 3), keepdims=True)
        return (y - m) / jnp.sqrt(v + 1e-5) * g[None, :, None, None] + be[None, :, None, None]

    lrelu = lambda t: jnp.where(t >= 0, t, 0.01 * t)
    y = bn(lrelu(conv(x, p["w1"], p["b1"], 1)), p["g1"], p["be1"])
    z = bn(lrelu(conv(y, p["w2"], p["b2"], 2)), p["g2"], p["be2"])
    return z


# ---------------------------------------------- main ---------------------------------------- #

if __name__ == "__main__":
    key = jax.random.PRNGKey(0)
    ks = jax.random.split(key, 9)

    n_b, c_in, h, w = 2, 4, 16, 16    # input NCHW (PyTorch convention)
    c_mid = 8                         # stridedBlock(inN=4, x=8)

    x_nchw = jax.random.normal(ks[0], (n_b, c_in, h, w), jnp.float32)

    params = {
        "w1": 0.1 * jax.random.normal(ks[1], (c_mid, c_in, 3, 3), jnp.float32),
        "b1": 0.1 * jax.random.normal(ks[2], (c_mid,), jnp.float32),
        "g1": 1.0 + 0.1 * jax.random.normal(ks[3], (c_mid,), jnp.float32),
        "be1": 0.1 * jax.random.normal(ks[4], (c_mid,), jnp.float32),
        "w2": 0.1 * jax.random.normal(ks[5], (c_mid, c_mid, 3, 3), jnp.float32),
        "b2": 0.1 * jax.random.normal(ks[6], (c_mid,), jnp.float32),
        "g2": 1.0 + 0.1 * jax.random.normal(ks[7], (c_mid,), jnp.float32),
        "be2": 0.1 * jax.random.normal(ks[8], (c_mid,), jnp.float32),
    }

    out = jax.block_until_ready(strided_block_forward(x_nchw, params))
    assert out.shape == (n_b, c_mid, h // 2, w // 2), out.shape

    ref = jax.block_until_ready(_ref_forward(x_nchw, params))
    # bf16 MXU operands (f32 accumulation / f32 BN statistics) vs. an all-f32 XLA reference.
    if not jnp.allclose(out, ref, atol=5e-2, rtol=5e-2):
        raise AssertionError(
            f"mismatch: max abs diff = {float(jnp.max(jnp.abs(out - ref)))}")

    print("KERNEL_OK")
</pallas_src>

<mosaic_0001>
module attributes {stable_mosaic.version = 11 : i64} {
  func.func @_conv_lrelu_bnstats_kernel(%arg0: i32, %arg1: memref<1x18x72xbf16, #tpu.memory_space<vmem>>, %arg2: memref<3x72x128xbf16, #tpu.memory_space<vmem>>, %arg3: memref<1x128xf32, #tpu.memory_space<vmem>>, %arg4: memref<1x16x128xbf16, #tpu.memory_space<vmem>>, %arg5: memref<1x2x128xf32, #tpu.memory_space<vmem>>) attributes {dimension_semantics = [#tpu.dimension_semantics<parallel>], iteration_bounds = array<i64: 2>, scalar_prefetch = 0 : i64, scratch_operands = 0 : i64, tpu.core_type = #tpu.core_type<tc>, window_params = [{transform_indices = @transform_0, window_bounds = array<i64: 1, 18, 72>}, {pipeline_mode = #tpu.pipeline_mode<synchronous>, transform_indices = @transform_1, window_bounds = array<i64: 3, 72, 128>}, {pipeline_mode = #tpu.pipeline_mode<synchronous>, transform_indices = @transform_2, window_bounds = array<i64: 1, 128>}, {transform_indices = @transform_3, window_bounds = array<i64: 1, 16, 128>}, {transform_indices = @transform_4, window_bounds = array<i64: 1, 2, 128>}]} {
    %c0 = arith.constant 0 : index
    %c0_0 = arith.constant 0 : index
    %c0_1 = arith.constant 0 : index
    %0 = vector.load %arg1[%c0, %c0_0, %c0_1] : memref<1x18x72xbf16, #tpu.memory_space<vmem>>, vector<1x16x72xbf16>
    %1 = vector.shape_cast %0 : vector<1x16x72xbf16> to vector<16x72xbf16>
    %c0_2 = arith.constant 0 : index
    %c0_3 = arith.constant 0 : index
    %c0_4 = arith.constant 0 : index
    %2 = vector.load %arg2[%c0_2, %c0_3, %c0_4] : memref<3x72x128xbf16, #tpu.memory_space<vmem>>, vector<1x72x128xbf16>
    %3 = vector.shape_cast %2 : vector<1x72x128xbf16> to vector<72x128xbf16>
    %cst = arith.constant dense<0.000000e+00> : vector<16x128xf32>
    %4 = tpu.matmul %1, %3, %cst {dimension_numbers = #tpu.dot_dimension_numbers<[1], [0], [0], [1], [0, 0, 1, 1], [], []>} : vector<16x72xbf16>, vector<72x128xbf16>, vector<16x128xf32> -> vector<16x128xf32>
    %c0_5 = arith.constant 0 : index
    %c1 = arith.constant 1 : index
    %c0_6 = arith.constant 0 : index
    %5 = vector.load %arg1[%c0_5, %c1, %c0_6] : memref<1x18x72xbf16, #tpu.memory_space<vmem>>, vector<1x16x72xbf16>
    %6 = vector.shape_cast %5 : vector<1x16x72xbf16> to vector<16x72xbf16>
    %c1_7 = arith.constant 1 : index
    %c0_8 = arith.constant 0 : index
    %c0_9 = arith.constant 0 : index
    %7 = vector.load %arg2[%c1_7, %c0_8, %c0_9] : memref<3x72x128xbf16, #tpu.memory_space<vmem>>, vector<1x72x128xbf16>
    %8 = vector.shape_cast %7 : vector<1x72x128xbf16> to vector<72x128xbf16>
    %cst_10 = arith.constant dense<0.000000e+00> : vector<16x128xf32>
    %9 = tpu.matmul %6, %8, %cst_10 {dimension_numbers = #tpu.dot_dimension_numbers<[1], [0], [0], [1], [0, 0, 1, 1], [], []>} : vector<16x72xbf16>, vector<72x128xbf16>, vector<16x128xf32> -> vector<16x128xf32>
    %10 = arith.addf %4, %9 : vector<16x128xf32>
    %c0_11 = arith.constant 0 : index
    %c2 = arith.constant 2 : index
    %c0_12 = arith.constant 0 : index
    %11 = vector.load %arg1[%c0_11, %c2, %c0_12] : memref<1x18x72xbf16, #tpu.memory_space<vmem>>, vector<1x16x72xbf16>
    %12 = vector.shape_cast %11 : vector<1x16x72xbf16> to vector<16x72xbf16>
    %c2_13 = arith.constant 2 : index
    %c0_14 = arith.constant 0 : index
    %c0_15 = arith.constant 0 : index
    %13 = vector.load %arg2[%c2_13, %c0_14, %c0_15] : memref<3x72x128xbf16, #tpu.memory_space<vmem>>, vector<1x72x128xbf16>
    %14 = vector.shape_cast %13 : vector<1x72x128xbf16> to vector<72x128xbf16>
    %cst_16 = arith.constant dense<0.000000e+00> : vector<16x128xf32>
    %15 = tpu.matmul %12, %14, %cst_16 {dimension_numbers = #tpu.dot_dimension_numbers<[1], [0], [0], [1], [0, 0, 1, 1], [], []>} : vector<16x72xbf16>, vector<72x128xbf16>, vector<16x128xf32> -> vector<16x128xf32>
    %16 = arith.addf %10, %15 : vector<16x128xf32>
    %c0_17 = arith.constant 0 : index
    %c0_18 = arith.constant 0 : index
    %17 = vector.load %arg3[%c0_17, %c0_18] : memref<1x128xf32, #tpu.memory_space<vmem>>, vector<1x128xf32>
    %18 = vector.broadcast %17 : vector<1x128xf32> to vector<16x128xf32>
    %19 = arith.addf %16, %18 : vector<16x128xf32>
    %cst_19 = arith.constant 0.000000e+00 : f32
    %20 = vector.broadcast %cst_19 : f32 to vector<16x128xf32>
    %21 = arith.cmpf oge, %19, %20 : vector<16x128xf32>
    %cst_20 = arith.constant 0.00999999977 : f32
    %22 = vector.broadcast %cst_20 : f32 to vector<16x128xf32>
    %23 = arith.mulf %22, %19 : vector<16x128xf32>
    %24 = arith.select %21, %19, %23 : vector<16x128xi1>, vector<16x128xf32>
    %25 = vector.shape_cast %24 : vector<16x128xf32> to vector<1x16x128xf32>
    %26 = arith.truncf %25 : vector<1x16x128xf32> to vector<1x16x128xbf16>
    %c0_21 = arith.constant 0 : index
    %c0_22 = arith.constant 0 : index
    %c0_23 = arith.constant 0 : index
    %27 = vector.load %arg4[%c0_21, %c0_22, %c0_23] : memref<1x16x128xbf16, #tpu.memory_space<vmem>>, vector<1x16x128xbf16>
    tpu.vector_store %arg4[%c0_21, %c0_22, %c0_23], %26 {strides = array<i32>} : memref<1x16x128xbf16, #tpu.memory_space<vmem>>, vector<1x16x128xbf16>,
    %cst_24 = arith.constant dense<0.000000e+00> : vector<128xf32>
    %28 = vector.multi_reduction <add>, %24, %cst_24 [0] : vector<16x128xf32> to vector<128xf32>
    %29 = vector.shape_cast %28 : vector<128xf32> to vector<1x128xf32>
    %30 = arith.mulf %24, %24 : vector<16x128xf32>
    %cst_25 = arith.constant dense<0.000000e+00> : vector<128xf32>
    %31 = vector.multi_reduction <add>, %30, %cst_25 [0] : vector<16x128xf32> to vector<128xf32>
    %32 = vector.shape_cast %31 : vector<128xf32> to vector<1x128xf32>
    %33 = tpu.concatenate %29, %32 in 0 : vector<1x128xf32>, vector<1x128xf32> -> vector<2x128xf32>
    %34 = vector.shape_cast %33 : vector<2x128xf32> to vector<1x2x128xf32>
    %c0_26 = arith.constant 0 : index
    %c0_27 = arith.constant 0 : index
    %c0_28 = arith.constant 0 : index
    %35 = vector.load %arg5[%c0_26, %c0_27, %c0_28] : memref<1x2x128xf32, #tpu.memory_space<vmem>>, vector<1x2x128xf32>
    tpu.vector_store %arg5[%c0_26, %c0_27, %c0_28], %34 {strides = array<i32>} : memref<1x2x128xf32, #tpu.memory_space<vmem>>, vector<1x2x128xf32>,
    return
  }
  func.func @transform_0(%arg0: i32) -> (i32, i32, i32) {
    %c0_i32 = arith.constant 0 : i32
    %c0_i32_0 = arith.constant 0 : i32
    %c0_i32_1 = arith.constant 0 : i32
    return %arg0, %c0_i32, %c0_i32_0 : i32, i32, i32
  }
  func.func @transform_1(%arg0: i32) -> (i32, i32, i32) {
    %c0_i32 = arith.constant 0 : i32
    %c0_i32_0 = arith.constant 0 : i32
    %c0_i32_1 = arith.constant 0 : i32
    %c0_i32_2 = arith.constant 0 : i32
    return %c0_i32, %c0_i32_0, %c0_i32_1 : i32, i32, i32
  }
  func.func @transform_2(%arg0: i32) -> (i32, i32) {
    %c0_i32 = arith.constant 0 : i32
    %c0_i32_0 = arith.constant 0 : i32
    %c0_i32_1 = arith.constant 0 : i32
    return %c0_i32, %c0_i32_0 : i32, i32
  }
  func.func @transform_3(%arg0: i32) -> (i32, i32, i32) {
    %c0_i32 = arith.constant 0 : i32
    %c0_i32_0 = arith.constant 0 : i32
    %c0_i32_1 = arith.constant 0 : i32
    return %arg0, %c0_i32, %c0_i32_0 : i32, i32, i32
  }
  func.func @transform_4(%arg0: i32) -> (i32, i32, i32) {
    %c0_i32 = arith.constant 0 : i32
    %c0_i32_0 = arith.constant 0 : i32
    %c0_i32_1 = arith.constant 0 : i32
    return %arg0, %c0_i32, %c0_i32_0 : i32, i32, i32
  }
}

module attributes {stable_mosaic.version = 11 : i64} {
  func.func @_conv_lrelu_bnstats_kernel(%arg0: i32, %arg1: memref<1x9x288xbf16, #tpu.memory_space<vmem>>, %arg2: memref<2x288x64xbf16, #tpu.memory_space<vmem>>, %arg3: memref<1x64xf32, #tpu.memory_space<vmem>>, %arg4: memref<1x8x64xf32, #tpu.memory_space<vmem>>, %arg5: memref<1x2x64xf32, #tpu.memory_space<vmem>>) attributes {dimension_semantics = [#tpu.dimension_semantics<parallel>], iteration_bounds = array<i64: 2>, scalar_prefetch = 0 : i64, scratch_operands = 0 : i64, tpu.core_type = #tpu.core_type<tc>, window_params = [{transform_indices = @transform_0, window_bounds = array<i64: 1, 9, 288>}, {pipeline_mode = #tpu.pipeline_mode<synchronous>, transform_indices = @transform_1, window_bounds = array<i64: 2, 288, 64>}, {pipeline_mode = #tpu.pipeline_mode<synchronous>, transform_indices = @transform_2, window_bounds = array<i64: 1, 64>}, {transform_indices = @transform_3, window_bounds = array<i64: 1, 8, 64>}, {transform_indices = @transform_4, window_bounds = array<i64: 1, 2, 64>}]} {
    %c0 = arith.constant 0 : index
    %c0_0 = arith.constant 0 : index
    %c0_1 = arith.constant 0 : index
    %0 = vector.load %arg1[%c0, %c0_0, %c0_1] : memref<1x9x288xbf16, #tpu.memory_space<vmem>>, vector<1x8x288xbf16>
    %1 = vector.shape_cast %0 : vector<1x8x288xbf16> to vector<8x288xbf16>
    %c0_2 = arith.constant 0 : index
    %c0_3 = arith.constant 0 : index
    %c0_4 = arith.constant 0 : index
    %2 = vector.load %arg2[%c0_2, %c0_3, %c0_4] : memref<2x288x64xbf16, #tpu.memory_space<vmem>>, vector<1x288x64xbf16>
    %3 = vector.shape_cast %2 : vector<1x288x64xbf16> to vector<288x64xbf16>
    %cst = arith.constant dense<0.000000e+00> : vector<8x64xf32>
    %4 = tpu.matmul %1, %3, %cst {dimension_numbers = #tpu.dot_dimension_numbers<[1], [0], [0], [1], [0, 0, 1, 1], [], []>} : vector<8x288xbf16>, vector<288x64xbf16>, vector<8x64xf32> -> vector<8x64xf32>
    %c0_5 = arith.constant 0 : index
    %c1 = arith.constant 1 : index
    %c0_6 = arith.constant 0 : index
    %5 = vector.load %arg1[%c0_5, %c1, %c0_6] : memref<1x9x288xbf16, #tpu.memory_space<vmem>>, vector<1x8x288xbf16>
    %6 = vector.shape_cast %5 : vector<1x8x288xbf16> to vector<8x288xbf16>
    %c1_7 = arith.constant 1 : index
    %c0_8 = arith.constant 0 : index
    %c0_9 = arith.constant 0 : index
    %7 = vector.load %arg2[%c1_7, %c0_8, %c0_9] : memref<2x288x64xbf16, #tpu.memory_space<vmem>>, vector<1x288x64xbf16>
    %8 = vector.shape_cast %7 : vector<1x288x64xbf16> to vector<288x64xbf16>
    %cst_10 = arith.constant dense<0.000000e+00> : vector<8x64xf32>
    %9 = tpu.matmul %6, %8, %cst_10 {dimension_numbers = #tpu.dot_dimension_numbers<[1], [0], [0], [1], [0, 0, 1, 1], [], []>} : vector<8x288xbf16>, vector<288x64xbf16>, vector<8x64xf32> -> vector<8x64xf32>
    %10 = arith.addf %4, %9 : vector<8x64xf32>
    %c0_11 = arith.constant 0 : index
    %c0_12 = arith.constant 0 : index
    %11 = vector.load %arg3[%c0_11, %c0_12] : memref<1x64xf32, #tpu.memory_space<vmem>>, vector<1x64xf32>
    %12 = vector.broadcast %11 : vector<1x64xf32> to vector<8x64xf32>
    %13 = arith.addf %10, %12 : vector<8x64xf32>
    %cst_13 = arith.constant 0.000000e+00 : f32
    %14 = vector.broadcast %cst_13 : f32 to vector<8x64xf32>
    %15 = arith.cmpf oge, %13, %14 : vector<8x64xf32>
    %cst_14 = arith.constant 0.00999999977 : f32
    %16 = vector.broadcast %cst_14 : f32 to vector<8x64xf32>
    %17 = arith.mulf %16, %13 : vector<8x64xf32>
    %18 = arith.select %15, %13, %17 : vector<8x64xi1>, vector<8x64xf32>
    %19 = vector.shape_cast %18 : vector<8x64xf32> to vector<1x8x64xf32>
    %c0_15 = arith.constant 0 : index
    %c0_16 = arith.constant 0 : index
    %c0_17 = arith.constant 0 : index
    %20 = vector.load %arg4[%c0_15, %c0_16, %c0_17] : memref<1x8x64xf32, #tpu.memory_space<vmem>>, vector<1x8x64xf32>
    tpu.vector_store %arg4[%c0_15, %c0_16, %c0_17], %19 {strides = array<i32>} : memref<1x8x64xf32, #tpu.memory_space<vmem>>, vector<1x8x64xf32>,
    %cst_18 = arith.constant dense<0.000000e+00> : vector<64xf32>
    %21 = vector.multi_reduction <add>, %18, %cst_18 [0] : vector<8x64xf32> to vector<64xf32>
    %22 = vector.shape_cast %21 : vector<64xf32> to vector<1x64xf32>
    %23 = arith.mulf %18, %18 : vector<8x64xf32>
    %cst_19 = arith.constant dense<0.000000e+00> : vector<64xf32>
    %24 = vector.multi_reduction <add>, %23, %cst_19 [0] : vector<8x64xf32> to vector<64xf32>
    %25 = vector.shape_cast %24 : vector<64xf32> to vector<1x64xf32>
    %26 = tpu.concatenate %22, %25 in 0 : vector<1x64xf32>, vector<1x64xf32> -> vector<2x64xf32>
    %27 = vector.shape_cast %26 : vector<2x64xf32> to vector<1x2x64xf32>
    %c0_20 = arith.constant 0 : index
    %c0_21 = arith.constant 0 : index
    %c0_22 = arith.constant 0 : index
    %28 = vector.load %arg5[%c0_20, %c0_21, %c0_22] : memref<1x2x64xf32, #tpu.memory_space<vmem>>, vector<1x2x64xf32>
    tpu.vector_store %arg5[%c0_20, %c0_21, %c0_22], %27 {strides = array<i32>} : memref<1x2x64xf32, #tpu.memory_space<vmem>>, vector<1x2x64xf32>,
    return
  }
  func.func @transform_0(%arg0: i32) -> (i32, i32, i32) {
    %c0_i32 = arith.constant 0 : i32
    %c0_i32_0 = arith.constant 0 : i32
    %c0_i32_1 = arith.constant 0 : i32
    return %arg0, %c0_i32, %c0_i32_0 : i32, i32, i32
  }
  func.func @transform_1(%arg0: i32) -> (i32, i32, i32) {
    %c0_i32 = arith.constant 0 : i32
    %c0_i32_0 = arith.constant 0 : i32
    %c0_i32_1 = arith.constant 0 : i32
    %c0_i32_2 = arith.constant 0 : i32
    return %c0_i32, %c0_i32_0, %c0_i32_1 : i32, i32, i32
  }
  func.func @transform_2(%arg0: i32) -> (i32, i32) {
    %c0_i32 = arith.constant 0 : i32
    %c0_i32_0 = arith.constant 0 : i32
    %c0_i32_1 = arith.constant 0 : i32
    return %c0_i32, %c0_i32_0 : i32, i32
  }
  func.func @transform_3(%arg0: i32) -> (i32, i32, i32) {
    %c0_i32 = arith.constant 0 : i32
    %c0_i32_0 = arith.constant 0 : i32
    %c0_i32_1 = arith.constant 0 : i32
    return %arg0, %c0_i32, %c0_i32_0 : i32, i32, i32
  }
  func.func @transform_4(%arg0: i32) -> (i32, i32, i32) {
    %c0_i32 = arith.constant 0 : i32
    %c0_i32_0 = arith.constant 0 : i32
    %c0_i32_1 = arith.constant 0 : i32
    return %arg0, %c0_i32, %c0_i32_0 : i32, i32, i32
  }
}

</mosaic_0001>

<llo_original>
// kernel: tile.23
$region0: #{tile.23}
  #allocation0 [shape = 's32[1]{0}', space=sflag, size = 0x4, scoped, tag = 'scoped memory for tile.23']
  %s0 = inlined_call_operand.vmem [shape: f32[8], index: 0, kind: input, shape index: {}]
  %s1 = inlined_call_operand.vmem [shape: f32[16,8], index: 1, kind: output, shape index: {}]
  // Predicated region
  $region2: #{tile.23} parent=0 // pred_check
    _
  $region3: #{tile.23} parent=0 // pred_check_branch
    %3 = sbr.rel (0) target = $region5
  $region4: #{tile.23} parent=0 // pred_region
    _
  $region5: #{tile.23} parent=0 // pred_fallthru
    _
  %v4 = vld [vmem:[%s0] ss:$0 sm:$0xff]
  %5 = vst [vmem:[%s1] sm:$0xff] %v4
  %s6 = scalar_lea.vmem %s1, 8
  %7 = vst [vmem:[%s6] sm:$0xff] %v4

// kernel: tile.24
$region0: #{tile.24}
  %s0 = inlined_call_operand.vmem [shape: f32[16,8], index: 0, kind: input, shape index: {}]
  %s1 = inlined_call_operand.vmem [shape: f32[1,128], index: 1, kind: output, shape index: {}]
  $region1: #{tile.24} parent=0
    #allocation0 [shape = 'u8[4096]{0}', space=vmem, size = 0x1000, scoped, tag = 'scoped mem for output reshape']
    %v2 = vld [vmem:[%s0] sm:$0x1]
    %vm3 = vcmask 64512
    %4 = vst.msk [vmem:[#allocation0] sm:$0x1] %vm3, %v2
    %s5 = scalar_lea.vmem %s0, 15
    %v6 = vld [vmem:[%s5] sm:$0x1]
    %7 = vrot.lane.b32.xlu0 %v6, 120
    %v8 = vpop.permute.xlu0 %7
    %vm9 = vcmask 1048512
    %10 = vst.msk [vmem:[#allocation0] sm:$0x1] %vm9, %v8
    %s11 = scalar_lea.vmem %s0, 14
    %v12 = vld [vmem:[%s11] sm:$0x1]
    %13 = vrot.lane.b32.xlu0 %v12, 112
    %v14 = vpop.permute.xlu0 %13
    %vm15 = vcmask 982912
    %16 = vst.msk [vmem:[#allocation0] sm:$0x1] %vm15, %v14
    %s17 = scalar_lea.vmem %s0, 13
    %v18 = vld [vmem:[%s17] sm:$0x1]
    %19 = vrot.lane.b32.xlu0 %v18, 104
    %v20 = vpop.permute.xlu0 %19
    %vm21 = vcmask 917312
    %22 = vst.msk [vmem:[#allocation0] sm:$0x1] %vm21, %v20
    %s23 = scalar_lea.vmem %s0, 12
    %v24 = vld [vmem:[%s23] sm:$0x1]
    %25 = vrot.lane.b32.xlu0 %v24, 96
    %v26 = vpop.permute.xlu0 %25
    %vm27 = vcmask 851712
    %28 = vst.msk [vmem:[#allocation0] sm:$0x1] %vm27, %v26
    %s29 = scalar_lea.vmem %s0, 11
    %v30 = vld [vmem:[%s29] sm:$0x1]
    %31 = vrot.lane.b32.xlu0 %v30, 88
    %v32 = vpop.permute.xlu0 %31
    %vm33 = vcmask 786112
    %34 = vst.msk [vmem:[#allocation0] sm:$0x1] %vm33, %v32
    %s35 = scalar_lea.vmem %s0, 10
    %v36 = vld [vmem:[%s35] sm:$0x1]
    %37 = vrot.lane.b32.xlu0 %v36, 80
    %v38 = vpop.permute.xlu0 %37
    %vm39 = vcmask 720512
    %40 = vst.msk [vmem:[#allocation0] sm:$0x1] %vm39, %v38
    %s41 = scalar_lea.vmem %s0, 9
    %v42 = vld [vmem:[%s41] sm:$0x1]
    %43 = vrot.lane.b32.xlu0 %v42, 72
    %v44 = vpop.permute.xlu0 %43
    %vm45 = vcmask 654912
    %46 = vst.msk [vmem:[#allocation0] sm:$0x1] %vm45, %v44
    %s47 = scalar_lea.vmem %s0, 8
    %v48 = vld [vmem:[%s47] sm:$0x1]
    %49 = vrot.lane.b32.xlu0 %v48, 64
    %v50 = vpop.permute.xlu0 %49
    %vm51 = vcmask 589312
    %52 = vst.msk [vmem:[#allocation0] sm:$0x1] %vm51, %v50
    %s53 = scalar_lea.vmem %s0, 7
    %v54 = vld [vmem:[%s53] sm:$0x1]
    %55 = vrot.lane.b32.xlu0 %v54, 56
    %v56 = vpop.permute.xlu0 %55
    %vm57 = vcmask 523712
    %58 = vst.msk [vmem:[#allocation0] sm:$0x1] %vm57, %v56
    %s59 = scalar_lea.vmem %s0, 6
    %v60 = vld [vmem:[%s59] sm:$0x1]
    %61 = vrot.lane.b32.xlu0 %v60, 48
    %v62 = vpop.permute.xlu0 %61
    %vm63 = vcmask 458112
    %64 = vst.msk [vmem:[#allocation0] sm:$0x1] %vm63, %v62
    %s65 = scalar_lea.vmem %s0, 5
    %v66 = vld [vmem:[%s65] sm:$0x1]
    %67 = vrot.lane.b32.xlu0 %v66, 40
    %v68 = vpop.permute.xlu0 %67
    %vm69 = vcmask 392512
    %70 = vst.msk [vmem:[#allocation0] sm:$0x1] %vm69, %v68
    %s71 = scalar_lea.vmem %s0, 4
    %v72 = vld [vmem:[%s71] sm:$0x1]
    %73 = vrot.lane.b32.xlu0 %v72, 32
    %v74 = vpop.permute.xlu0 %73
    %vm75 = vcmask 326912
    %76 = vst.msk [vmem:[#allocation0] sm:$0x1] %vm75, %v74
    %s77 = scalar_lea.vmem %s0, 3
    %v78 = vld [vmem:[%s77] sm:$0x1]
    %79 = vrot.lane.b32.xlu0 %v78, 24
    %v80 = vpop.permute.xlu0 %79
    %vm81 = vcmask 261312
    %82 = vst.msk [vmem:[#allocation0] sm:$0x1] %vm81, %v80
    %s83 = scalar_lea.vmem %s0, 2
    %v84 = vld [vmem:[%s83] sm:$0x1]
    %85 = vrot.lane.b32.xlu0 %v84, 16
    %v86 = vpop.permute.xlu0 %85
    %vm87 = vcmask 195712
    %88 = vst.msk [vmem:[#allocation0] sm:$0x1] %vm87, %v86
    %s89 = scalar_lea.vmem %s0, 1
    %v90 = vld [vmem:[%s89] sm:$0x1]
    %91 = vrot.lane.b32.xlu0 %v90, 8
    %v92 = vpop.permute.xlu0 %91
    %vm93 = vcmask 130112
    %94 = vst.msk [vmem:[#allocation0] sm:$0x1] %vm93, %v92
    %s96 = sshllo.u32 0, 1
    %v98 = vld [vmem:[#allocation0] sm:%s96]
    %s99 = sshllo.u32 0, 1
    %100 = vst [vmem:[%s1] sm:%s99] %v98

// kernel: strided_block_forward.2
$region0: #{strided_block_forward.2}
  #allocation0 [shape = 'u32[]', space=smem, size = 0x4, offset = 0x4, fixed_abs, tag = 'smem constant byte address 0x4 - core index']
  #allocation1 [shape = 'u32[144,128]{1,0:T(1,128)}', space=vmem, size = 0x12000, scoped, tag = 'internal scratch']
  %s0 = inlined_call_operand.vmem [shape: bf16[2,18,72], index: 0, kind: input, shape index: {}]
  %s1 = inlined_call_operand.vmem [shape: bf16[3,72,128], index: 1, kind: input, shape index: {}]
  %s2 = inlined_call_operand.vmem [shape: f32[1,128], index: 2, kind: input, shape index: {}]
  %s3 = inlined_call_operand.vmem [shape: bf16[2,16,128], index: 3, kind: output, shape index: {0}]
  %s4 = inlined_call_operand.vmem [shape: f32[2,2,128], index: 4, kind: output, shape index: {1}]
  %5 = xla_tuple %s3, %s4
  %s6 = sld [smem:[#allocation0]]
  $region53: #{strided_block_forward.2} parent=0
    _
  %s8 = ssub.s32 1, %s6
  %s9 = scalar_select 0, %s8, %s6
  loop: start=0, step=1, limit=4
  $region2: #{strided_block_forward.2} parent=0 // loop_pre_header
    _
  $region3: #{strided_block_forward.2} parent=0 // loop_header
    %s11 = sphi 0, %s15
    %p12 = scmp.ge.s32.totalorder %s11, 4
    %s21 = sphi 0, %s23
    %s24 = sphi 0, %s21
    %s25 = sphi 0, %s24
    %s41 = sphi 0, %s25
    %s45 = sphi 0, %s45
    %s47 = sphi 0, %s45
    %s48 = sphi 0, %s47
    %s62 = sphi 0, %s48
    %s66 = sphi 0, %s66
    %s68 = sphi 0, %s66
    %s69 = sphi 0, %s68
    %s83 = sphi 0, %s69
    %s89 = sphi 0, %s91
    %s92 = sphi 0, %s89
    %s93 = sphi 0, %s92
    %s109 = sphi 0, %s93
    %s115 = sphi 0, %s117
    %s118 = sphi 0, %s115
    %s119 = sphi 0, %s118
    %s135 = sphi 0, %s119
  $region4: #{strided_block_forward.2} parent=0 // loop_header_branch
    %14 = sbr.rel (%p12) target = $region8
  $region5: #{strided_block_forward.2} parent=0 // loop_body
    %s16 = ssub.s32 %s11, 1
    %s17 = ssub.s32 %s11, 2
    %s18 = sadd.s32 %s11, 1
    %s19 = ssub.s32 %s11, %s18
    %p20 = scmp.eq.s32.totalorder %s19, 0
    %s22 = sadd.s32 %s21, 1
    %s23 = scalar_select %p20, %s21, %s22
    %p26 = pneg %p20
    %p27 = scmp.eq.s32.totalorder %s11, 1
    %p28 = por %p26, %p27
    %p29 = scmp.ne.s32.totalorder %s21, %s24
    %p30 = scmp.eq.s32.totalorder %s11, 0
    %p31 = por %p29, %p30
    %p32 = scmp.ne.s32.totalorder %s21, %s24
    %p33 = scmp.eq.s32.totalorder %s16, 1
    %p34 = por %p32, %p33
    %p35 = scmp.ne.s32.totalorder %s24, %s25
    %p36 = scmp.eq.s32.totalorder %s16, 0
    %p37 = por %p35, %p36
    %p38 = scmp.ne.s32.totalorder %s24, %s25
    %p39 = scmp.eq.s32.totalorder %s17, 1
    %p40 = por %p38, %p39
    %p42 = scmp.ne.s32.totalorder %s25, %s41
    %p43 = scmp.eq.s32.totalorder %s17, 0
    %p44 = por %p42, %p43
    %s46 = sadd.s32 %s45, 1
    %p49 = scmp.eq.s32.totalorder %s11, 1
    %p50 = scmp.ne.s32.totalorder %s45, %s47
    %p51 = scmp.eq.s32.totalorder %s11, 0
    %p52 = por %p50, %p51
    %p53 = scmp.ne.s32.totalorder %s45, %s47
    %p54 = scmp.eq.s32.totalorder %s16, 1
    %p55 = por %p53, %p54
    %p56 = scmp.ne.s32.totalorder %s47, %s48
    %p57 = scmp.eq.s32.totalorder %s16, 0
    %p58 = por %p56, %p57
    %p59 = scmp.ne.s32.totalorder %s47, %s48
    %p60 = scmp.eq.s32.totalorder %s17, 1
    %p61 = por %p59, %p60
    %p63 = scmp.ne.s32.totalorder %s48, %s62
    %p64 = scmp.eq.s32.totalorder %s17, 0
    %p65 = por %p63, %p64
    %s67 = sadd.s32 %s66, 1
    %p70 = scmp.eq.s32.totalorder %s11, 1
    %p71 = scmp.ne.s32.totalorder %s66, %s68
    %p72 = scmp.eq.s32.totalorder %s11, 0
    %p73 = por %p71, %p72
    %p74 = scmp.ne.s32.totalorder %s66, %s68
    %p75 = scmp.eq.s32.totalorder %s16, 1
    %p76 = por %p74, %p75
    %p77 = scmp.ne.s32.totalorder %s68, %s69
    %p78 = scmp.eq.s32.totalorder %s16, 0
    %p79 = por %p77, %p78
    %p80 = scmp.ne.s32.totalorder %s68, %s69
    %p81 = scmp.eq.s32.totalorder %s17, 1
    %p82 = por %p80, %p81
    %p84 = scmp.ne.s32.totalorder %s69, %s83
    %p85 = scmp.eq.s32.totalorder %s17, 0
    %p86 = por %p84, %p85
    %s87 = ssub.s32 %s11, %s18
    %p88 = scmp.eq.s32.totalorder %s87, 0
    %s90 = sadd.s32 %s89, 1
    %s91 = scalar_select %p88, %s89, %s90
    %p94 = pneg %p88
    %p95 = scmp.eq.s32.totalorder %s11, 1
    %p96 = por %p94, %p95
    %p97 = scmp.ne.s32.totalorder %s89, %s92
    %p98 = scmp.eq.s32.totalorder %s11, 0
    %p99 = por %p97, %p98
    %p100 = scmp.ne.s32.totalorder %s89, %s92
    %p101 = scmp.eq.s32.totalorder %s16, 1
    %p102 = por %p100, %p101
    %p103 = scmp.ne.s32.totalorder %s92, %s93
    %p104 = scmp.eq.s32.totalorder %s16, 0
    %p105 = por %p103, %p104
    %p106 = scmp.ne.s32.totalorder %s92, %s93
    %p107 = scmp.eq.s32.totalorder %s17, 1
    %p108 = por %p106, %p107
    %p110 = scmp.ne.s32.totalorder %s93, %s109
    %p111 = scmp.eq.s32.totalorder %s17, 0
    %p112 = por %p110, %p111
    %s113 = ssub.s32 %s11, %s18
    %p114 = scmp.eq.s32.totalorder %s113, 0
    %s116 = sadd.s32 %s115, 1
    %s117 = scalar_select %p114, %s115, %s116
    %p120 = pneg %p114
    %p121 = scmp.eq.s32.totalorder %s11, 1
    %p122 = por %p120, %p121
    %p123 = scmp.ne.s32.totalorder %s115, %s118
    %p124 = scmp.eq.s32.totalorder %s11, 0
    %p125 = por %p123, %p124
    %p126 = scmp.ne.s32.totalorder %s115, %s118
    %p127 = scmp.eq.s32.totalorder %s16, 1
    %p128 = por %p126, %p127
    %p129 = scmp.ne.s32.totalorder %s118, %s119
    %p130 = scmp.eq.s32.totalorder %s16, 0
    %p131 = por %p129, %p130
    %p132 = scmp.ne.s32.totalorder %s118, %s119
    %p133 = scmp.eq.s32.totalorder %s17, 1
    %p134 = por %p132, %p133
    %p136 = scmp.ne.s32.totalorder %s119, %s135
    %p137 = scmp.eq.s32.totalorder %s17, 0
    %p138 = por %p136, %p137
    %p139 = scmp.le.s32.totalorder 1, %s11
    %p140 = scmp.lt.s32.totalorder %s11, 3
    %p141 = pnand %p139, %p140
    %p142 = pneg %p141
    // Predicated region
    $region9: #{strided_block_forward.2} parent=5 // pred_check
      _
    $region10: #{strided_block_forward.2} parent=5 // pred_check_branch
      %144 = sbr.rel (%p141) target = $region12
    $region11: #{strided_block_forward.2} parent=5 // pred_region
      %s145 = ssub.s32 %s11, 1
      // Predicated region
      $region13: #{strided_block_forward.2} parent=11 // pred_check
        %p146 = pneg %p58
      $region14: #{strided_block_forward.2} parent=11 // pred_check_branch
        %148 = sbr.rel (%p146) target = $region16
      $region15: #{strided_block_forward.2} parent=11 // pred_region
        _
      $region16: #{strided_block_forward.2} parent=11 // pred_fallthru
        _
      // Predicated region
      $region17: #{strided_block_forward.2} parent=11 // pred_check
        %p149 = pneg %p79
      $region18: #{strided_block_forward.2} parent=11 // pred_check_branch
        %151 = sbr.rel (%p149) target = $region20
      $region19: #{strided_block_forward.2} parent=11 // pred_region
        _
      $region20: #{strided_block_forward.2} parent=11 // pred_fallthru
        _
    $region12: #{strided_block_forward.2} parent=5 // pred_fallthru
      _
    %p152 = scmp.lt.s32.totalorder %s11, 2
    // Predicated region
    $region21: #{strided_block_forward.2} parent=5 // pred_check
      %p153 = pneg %p152
    $region22: #{strided_block_forward.2} parent=5 // pred_check_branch
      %155 = sbr.rel (%p153) target = $region24
    $region23: #{strided_block_forward.2} parent=5 // pred_region
      // Predicated region
      $region25: #{strided_block_forward.2} parent=23 // pred_check
        %p156 = pneg %p31
      $region26: #{strided_block_forward.2} parent=23 // pred_check_branch
        %158 = sbr.rel (%p156) target = $region28
      $region27: #{strided_block_forward.2} parent=23 // pred_region
        %p159 = scmp.lt.s32.totalorder %s11, 1
        %s160 = scalar_select %p159, %s11, 1
        %s161 = smul.addr %s160, 3
        %s162 = smul.addr %s161, 4
        %s163 = scalar_lea.vmem %s0, %s162
      $region28: #{strided_block_forward.2} parent=23 // pred_fallthru
        _
    $region24: #{strided_block_forward.2} parent=5 // pred_fallthru
      _
    %p164 = scmp.le.s32.totalorder 1, %s11
    %p165 = scmp.lt.s32.totalorder %s11, 3
    %p166 = pnand %p164, %p165
    %p167 = pneg %p166
    // Predicated region
    $region29: #{strided_block_forward.2} parent=5 // pred_check
      _
    $region30: #{strided_block_forward.2} parent=5 // pred_check_branch
      %169 = sbr.rel (%p166) target = $region32
    $region31: #{strided_block_forward.2} parent=5 // pred_region
      %s170 = ssub.s32 %s11, 1
      %p171 = scmp.lt.s32.totalorder %s16, 1
      %s172 = scalar_select %p171, %s16, 1
      %s173 = smul.addr %s172, 3
      %s174 = smul.addr %s173, 4
      %s175 = scalar_lea.vmem %s0, %s174
      %p176 = pneg %p37
      %p177 = pneg %p34
      %p178 = pneg %p58
      %p179 = pneg %p55
      %p180 = pneg %p79
      %p181 = pneg %p76
      %p182 = pneg %p105
      %p183 = pneg %p102
      %p184 = scmp.lt.s32.totalorder %s16, 1
      %s185 = scalar_select %p184, %s16, 1
      %s186 = smul.addr %s185, 2
      %s187 = smul.addr %s186, 4
      %s188 = scalar_lea.vmem %s3, %s187
      %p189 = pneg %p131
      %p190 = pneg %p128
      %p191 = scmp.lt.s32.totalorder %s16, 1
      %s192 = scalar_select %p191, %s16, 1
      %s193 = smul.addr %s192, 2
      %s194 = scalar_lea.vmem %s4, %s193
      %p195 = scmp.lt.s32.totalorder %s16, 1
      %s196 = scalar_select %p195, %s16, 1
      %s197 = smul.addr %s196, 3
      %s198 = smul.addr %s197, 4
      %s199 = scalar_lea.vmem %s0, %s198
      %p200 = scmp.lt.s32.totalorder %s16, 1
      %s201 = scalar_select %p200, %s16, 1
      %s202 = smul.addr %s201, 2
      %s203 = smul.addr %s202, 4
      %s204 = scalar_lea.vmem %s3, %s203
      %p205 = scmp.lt.s32.totalorder %s16, 1
      %s206 = scalar_select %p205, %s16, 1
      %s207 = smul.addr %s206, 2
      %s208 = scalar_lea.vmem %s4, %s207
      %v210 = vld [vmem:[%s199] sm:$0xf]
      %v211 = vld [vmem:[%s199 + $0x4] sm:$0xf]
      %v212 = vld [vmem:[%s1] sm:$0xf]
      %v213 = vld [vmem:[%s1 + $0x4] sm:$0xf]
      %v214 = vld [vmem:[%s1 + $0x8] sm:$0xf]
      %v215 = vld [vmem:[%s1 + $0xc] sm:$0xf]
      %v216 = vld [vmem:[%s1 + $0x10] sm:$0xf]
      %v217 = vld [vmem:[%s1 + $0x14] sm:$0xf]
      %v218 = vld [vmem:[%s1 + $0x18] sm:$0xf]
      %v219 = vld [vmem:[%s1 + $0x1c] sm:$0xf]
      %v220 = vld [vmem:[%s1 + $0x20] sm:$0xf]
      %v221 = vld [vmem:[%s199 + $0x8] sm:$0x1]
      %s222 = scalar_lea.vmem %s1, 36
      %v223 = vld [vmem:[%s222] sm:$0xf]
      %v224 = vld [vmem:[%s222 + $0x4] sm:$0xf]
      %v225 = vld [vmem:[%s222 + $0x8] sm:$0xf]
      %v226 = vld [vmem:[%s222 + $0xc] sm:$0xf]
      %v227 = vld [vmem:[%s222 + $0x10] sm:$0xf]
      %v228 = vld [vmem:[%s222 + $0x14] sm:$0xf]
      %v229 = vld [vmem:[%s222 + $0x18] sm:$0xf]
      %v230 = vld [vmem:[%s222 + $0x1c] sm:$0xf]
      %v231 = vld [vmem:[%s222 + $0x20] sm:$0xf]
      %v235 = vunpack.c.l.b16 %v210
      %v236 = vunpack.c.l.b16 %v211
      %v237 = vunpack.c.l.b16 %v221
      %v238 = vpack.c.b16 %v236, %v235
      %v239 = vpack.c.b16 %v237, %v237
      %vm240 = vsmask.f32 7424
      %v242 = vshrl.u32 %v238, 16
      %v244 = vshll.u32 %v238, 16
      %v246 = vrot.slane %v244, 1
      %v247 = vor.u32 %v242, %v246
      %v249 = vshll.u32 %v239, 16
      %v251 = vrot.slane %v249, 1
      %v252 = vsel %vm240, %v247, %v251
      %v262 = vunpack.c.l.b16 %v223
      %v263 = vunpack.c.l.b16 %v224
      %v264 = vunpack.c.l.b16 %v225
      %v265 = vunpack.c.l.b16 %v226
      %v266 = vunpack.c.l.b16 %v227
      %v267 = vunpack.c.l.b16 %v228
      %v268 = vunpack.c.l.b16 %v229
      %v269 = vunpack.c.l.b16 %v230
      %v270 = vunpack.c.l.b16 %v231
      %v271 = vpack.c.b16 %v263, %v262
      %v272 = vpack.c.b16 %v265, %v264
      %v273 = vpack.c.b16 %v267, %v266
      %v274 = vpack.c.b16 %v269, %v268
      %v275 = vpack.c.b16 %v270, %v270
      %vm280 = vcmask 588800
      %v282 = vsel %vm280, %v252, 0
      %vm284 = vcmask 1043456
      %v286 = vsel %vm284, %v275, 0
      %288 = vmatprep.subr.bf16.mxu0 0
      %289 = vmatpush1.bf16.msra.mxu0 %v271
      %290 = vmatprep.subr.bf16.mxu0 0
      %291 = vmatpush1.bf16.msra.mxu0 %v272
      %292 = vmatprep.subr.bf16.mxu0 0
      %293 = vmatpush1.bf16.msra.mxu0 %v273
      %294 = vmatprep.subr.bf16.mxu0 0
      %295 = vmatpush1.bf16.msra.mxu0 %v274
      %296 = vmatprep.subr.bf16.mxu0 0
      %297 = vmatpush1.bf16.msra.mxu0 %v286
      %298 = vmatprep.subr.bf16.mxu0 0
      %299 = vmatpush1.bf16.msra.mxu0 0
      %300 = vmatprep.subr.bf16.mxu0 0
      %301 = vmatpush1.bf16.msra.mxu0 0
      %302 = vmatprep.subr.bf16.mxu0 0
      %303 = vmatpush1.bf16.msra.mxu0 0
      %304 = vmatprep.subr.bf16.mxu0 0
      %305 = vmatpush1.bf16.msra.mxu0 0
      %306 = vmatprep.subr.bf16.mxu0 0
      %307 = vmatpush1.bf16.msra.mxu0 0
      %308 = vmatprep.subr.bf16.mxu0 0
      %309 = vmatpush1.bf16.msra.mxu0 0
      %310 = vmatprep.subr.bf16.mxu0 0
      %311 = vmatpush1.bf16.msra.mxu0 0
      %312 = vmatprep.subr.bf16.mxu0 0
      %313 = vmatpush1.bf16.msra.mxu0 0
      %314 = vmatprep.subr.bf16.mxu0 0
      %315 = vmatpush1.bf16.msra.mxu0 0
      %316 = vmatprep.subr.bf16.mxu0 0
      %317 = vmatpush1.bf16.msra.mxu0 0
      %318 = vmatprep.subr.bf16.mxu0 0
      %319 = vmatpush1.bf16.msra.mxu0 0
      %320 = vmatprep.mubr.bf16.mxu0 0
      %321 = vmatmul.mubr.bf16.gmra.mrb[0].mxu0 %v282
      %v322 = vpop.f32.mrb[0].mxu0
      %v323 = vadd.f32 0.0, %v322
      %v324 = vpop.f32.mrb[0].mxu0
      %v325 = vpop.f32.mrb[0].mxu0
      %v326 = vadd.f32 0.0, %v325
      %v327 = vpop.f32.mrb[0].mxu0
      %328 = vdwg.mxu0
      %v338 = vunpack.c.l.b16 %v212
      %v339 = vunpack.c.l.b16 %v213
      %v340 = vunpack.c.l.b16 %v214
      %v341 = vunpack.c.l.b16 %v215
      %v342 = vunpack.c.l.b16 %v216
      %v343 = vunpack.c.l.b16 %v217
      %v344 = vunpack.c.l.b16 %v218
      %v345 = vunpack.c.l.b16 %v219
      %v346 = vunpack.c.l.b16 %v220
      %v347 = vpack.c.b16 %v339, %v338
      %v348 = vpack.c.b16 %v341, %v340
      %v349 = vpack.c.b16 %v343, %v342
      %v350 = vpack.c.b16 %v345, %v344
      %v351 = vpack.c.b16 %v346, %v346
      %v356 = vsel %vm280, %v238, 0
      %v359 = vsel %vm284, %v351, 0
      %361 = vmatprep.subr.bf16.mxu0 0
      %362 = vmatpush1.bf16.msra.mxu0 %v347
      %363 = vmatprep.subr.bf16.mxu0 0
      %364 = vmatpush1.bf16.msra.mxu0 %v348
      %365 = vmatprep.subr.bf16.mxu0 0
      %366 = vmatpush1.bf16.msra.mxu0 %v349
      %367 = vmatprep.subr.bf16.mxu0 0
      %368 = vmatpush1.bf16.msra.mxu0 %v350
      %369 = vmatprep.subr.bf16.mxu0 0
      %370 = vmatpush1.bf16.msra.mxu0 %v359
      %371 = vmatprep.subr.bf16.mxu0 0
      %372 = vmatpush1.bf16.msra.mxu0 0
      %373 = vmatprep.subr.bf16.mxu0 0
      %374 = vmatpush1.bf16.msra.mxu0 0
      %375 = vmatprep.subr.bf16.mxu0 0
      %376 = vmatpush1.bf16.msra.mxu0 0
      %377 = vmatprep.subr.bf16.mxu0 0
      %378 = vmatpush1.bf16.msra.mxu0 0
      %379 = vmatprep.subr.bf16.mxu0 0
      %380 = vmatpush1.bf16.msra.mxu0 0
      %381 = vmatprep.subr.bf16.mxu0 0
      %382 = vmatpush1.bf16.msra.mxu0 0
      %383 = vmatprep.subr.bf16.mxu0 0
      %384 = vmatpush1.bf16.msra.mxu0 0
      %385 = vmatprep.subr.bf16.mxu0 0
      %386 = vmatpush1.bf16.msra.mxu0 0
      %387 = vmatprep.subr.bf16.mxu0 0
      %388 = vmatpush1.bf16.msra.mxu0 0
      %389 = vmatprep.subr.bf16.mxu0 0
      %390 = vmatpush1.bf16.msra.mxu0 0
      %391 = vmatprep.subr.bf16.mxu0 0
      %392 = vmatpush1.bf16.msra.mxu0 0
      %393 = vmatprep.mubr.bf16.mxu0 0
      %394 = vmatmul.mubr.bf16.gmra.mrb[0].mxu0 %v356
      %v395 = vpop.f32.mrb[0].mxu0
      %v396 = vadd.f32 %v323, %v395
      %v397 = vpop.f32.mrb[0].mxu0
      %v398 = vpop.f32.mrb[0].mxu0
      %v399 = vadd.f32 %v326, %v398
      %v400 = vpop.f32.mrb[0].mxu0
      %401 = vdwg.mxu0
      %v402 = vld [vmem:[%s199] sm:$0xe]
      %s403 = scalar_lea.vmem %s1, 72
      %v404 = vld [vmem:[%s403] sm:$0xf]
      %v405 = vld [vmem:[%s403 + $0x4] sm:$0xf]
      %v406 = vld [vmem:[%s403 + $0x8] sm:$0xf]
      %v407 = vld [vmem:[%s403 + $0xc] sm:$0xf]
      %v408 = vld [vmem:[%s403 + $0x10] sm:$0xf]
      %v409 = vld [vmem:[%s403 + $0x14] sm:$0xf]
      %v410 = vld [vmem:[%s403 + $0x18] sm:$0xf]
      %v411 = vld [vmem:[%s403 + $0x1c] sm:$0xf]
      %v412 = vld [vmem:[%s403 + $0x20] sm:$0xf]
      %v414 = vunpack.c.l.b16 %v402
      %v415 = vpack.c.b16 %v236, %v414
      %vm416 = vcmask 1046528
      %v417 = vrot.slane %v415, 1
      %v418 = vrot.slane %v239, 1
      %v419 = vsel %vm416, %v417, %v418
      %v429 = vunpack.c.l.b16 %v404
      %v430 = vunpack.c.l.b16 %v405
      %v431 = vunpack.c.l.b16 %v406
      %v432 = vunpack.c.l.b16 %v407
      %v433 = vunpack.c.l.b16 %v408
      %v434 = vunpack.c.l.b16 %v409
      %v435 = vunpack.c.l.b16 %v410
      %v436 = vunpack.c.l.b16 %v411
      %v437 = vunpack.c.l.b16 %v412
      %v438 = vpack.c.b16 %v430, %v429
      %v439 = vpack.c.b16 %v432, %v431
      %v440 = vpack.c.b16 %v434, %v433
      %v441 = vpack.c.b16 %v436, %v435
      %v442 = vpack.c.b16 %v437, %v437
      %v448 = vsel %vm280, %v419, 0
      %v451 = vsel %vm284, %v442, 0
      %453 = vmatprep.subr.bf16.mxu0 0
      %454 = vmatpush1.bf16.msra.mxu0 %v438
      %455 = vmatprep.subr.bf16.mxu0 0
      %456 = vmatpush1.bf16.msra.mxu0 %v439
      %457 = vmatprep.subr.bf16.mxu0 0
      %458 = vmatpush1.bf16.msra.mxu0 %v440
      %459 = vmatprep.subr.bf16.mxu0 0
      %460 = vmatpush1.bf16.msra.mxu0 %v441
      %461 = vmatprep.subr.bf16.mxu0 0
      %462 = vmatpush1.bf16.msra.mxu0 %v451
      %463 = vmatprep.subr.bf16.mxu0 0
      %464 = vmatpush1.bf16.msra.mxu0 0
      %465 = vmatprep.subr.bf16.mxu0 0
      %466 = vmatpush1.bf16.msra.mxu0 0
      %467 = vmatprep.subr.bf16.mxu0 0
      %468 = vmatpush1.bf16.msra.mxu0 0
      %469 = vmatprep.subr.bf16.mxu0 0
      %470 = vmatpush1.bf16.msra.mxu0 0
      %471 = vmatprep.subr.bf16.mxu0 0
      %472 = vmatpush1.bf16.msra.mxu0 0
      %473 = vmatprep.subr.bf16.mxu0 0
      %474 = vmatpush1.bf16.msra.mxu0 0
      %475 = vmatprep.subr.bf16.mxu0 0
      %476 = vmatpush1.bf16.msra.mxu0 0
      %477 = vmatprep.subr.bf16.mxu0 0
      %478 = vmatpush1.bf16.msra.mxu0 0
      %479 = vmatprep.subr.bf16.mxu0 0
      %480 = vmatpush1.bf16.msra.mxu0 0
      %481 = vmatprep.subr.bf16.mxu0 0
      %482 = vmatpush1.bf16.msra.mxu0 0
      %483 = vmatprep.subr.bf16.mxu0 0
      %484 = vmatpush1.bf16.msra.mxu0 0
      %485 = vmatprep.mubr.bf16.mxu0 0
      %486 = vmatmul.mubr.bf16.gmra.mrb[0].mxu0 %v448
      %v487 = vpop.f32.mrb[0].mxu0
      %v488 = vadd.f32 0.0, %v487
      %v489 = vpop.f32.mrb[0].mxu0
      %v490 = vpop.f32.mrb[0].mxu0
      %v491 = vadd.f32 0.0, %v490
      %v492 = vpop.f32.mrb[0].mxu0
      %493 = vdwg.mxu0
      %v494 = vadd.f32 %v396, %v488
      %v495 = vadd.f32 %v399, %v491
      %v496 = vld [vmem:[%s2] sm:$0x1]
      %v498 = vlaneseq
      %v499 = vshrl.u32 %v498, 7
      %v500 = vsub.s32 0, %v499
      %v501 = vrot.slane %v496, %v500
      %v503 = vadd.f32 %v494, %v501
      %v504 = vadd.f32 %v495, %v501
      %vm505 = vcmp.ge.f32.partialorder %v503, 0.0
      %vm506 = vcmp.ge.f32.partialorder %v504, 0.0
      %v507 = vmul.f32 %v503, 0.01
      %v508 = vmul.f32 %v504, 0.01
      %v509 = vsel %vm505, %v503, %v507
      %v510 = vsel %vm506, %v504, %v508
      %v511 = vpack.c.bf16 %v510, %v509
      %v513 = vunpack.c.l.b16 %v511
      %v514 = vunpack.c.h.b16 %v511
      %v515 = vpack.c.b16 %v513, %v513
      %v516 = vpack.c.b16 %v514, %v514
      %519 = vst [vmem:[%s204] sm:$0xf] %v515
      %520 = vst [vmem:[%s204 + $0x4] sm:$0xf] %v516
      %v521 = vadd.f32 %v509, %v510
      %v522 = vrot.slane %v521, 4
      %v523 = vadd.f32 %v521, %v522
      %v524 = vrot.slane %v523, 2
      %v525 = vadd.f32 %v523, %v524
      %v526 = vrot.slane %v525, 1
      %v527 = vadd.f32 %v525, %v526
      %v528 = vmul.f32 %v509, %v509
      %v529 = vmul.f32 %v510, %v510
      %v530 = vadd.f32 %v528, %v529
      %v531 = vrot.slane %v530, 4
      %v532 = vadd.f32 %v530, %v531
      %v533 = vrot.slane %v532, 2
      %v534 = vadd.f32 %v532, %v533
      %v535 = vrot.slane %v534, 1
      %v536 = vadd.f32 %v534, %v535
      %vm537 = vcmask 1040384
      %v538 = vsel %vm537, %v527, %v536
      %539 = vst [vmem:[%s208] sm:$0x3] %v538
      %p540 = scmp.lt.s32.totalorder %s16, 1
      %s541 = scalar_select %p540, %s16, 1
      %s542 = smul.addr %s541, 2
      %s543 = smul.addr %s542, 4
      %s544 = scalar_lea.vmem %s3, %s543
      %p545 = scmp.lt.s32.totalorder %s16, 1
      %s546 = scalar_select %p545, %s16, 1
      %s547 = smul.addr %s546, 2
      %s548 = scalar_lea.vmem %s4, %s547
      // Predicated region
      $region33: #{strided_block_forward.2} parent=31 // pred_check
        %p549 = pneg %p102
      $region34: #{strided_block_forward.2} parent=31 // pred_check_branch
        %551 = sbr.rel (%p549) target = $region36
      $region35: #{strided_block_forward.2} parent=31 // pred_region
        _
      $region36: #{strided_block_forward.2} parent=31 // pred_fallthru
        _
      // Predicated region
      $region37: #{strided_block_forward.2} parent=31 // pred_check
        %p552 = pneg %p128
      $region38: #{strided_block_forward.2} parent=31 // pred_check_branch
        %554 = sbr.rel (%p552) target = $region40
      $region39: #{strided_block_forward.2} parent=31 // pred_region
        _
      $region40: #{strided_block_forward.2} parent=31 // pred_fallthru
        _
    $region32: #{strided_block_forward.2} parent=5 // pred_fallthru
      _
    %p555 = scmp.le.s32.totalorder 2, %s11
    // Predicated region
    $region41: #{strided_block_forward.2} parent=5 // pred_check
      %p556 = pneg %p555
    $region42: #{strided_block_forward.2} parent=5 // pred_check_branch
      %558 = sbr.rel (%p556) target = $region44
    $region43: #{strided_block_forward.2} parent=5 // pred_region
      %s559 = ssub.s32 %s11, 2
      // Predicated region
      $region45: #{strided_block_forward.2} parent=43 // pred_check
        %p560 = pneg %p108
      $region46: #{strided_block_forward.2} parent=43 // pred_check_branch
        %562 = sbr.rel (%p560) target = $region48
      $region47: #{strided_block_forward.2} parent=43 // pred_region
        %p563 = scmp.lt.s32.totalorder %s17, 1
        %s564 = scalar_select %p563, %s17, 1
        %s565 = smul.addr %s564, 2
        %s566 = smul.addr %s565, 4
        %s567 = scalar_lea.vmem %s3, %s566
      $region48: #{strided_block_forward.2} parent=43 // pred_fallthru
        _
      // Predicated region
      $region49: #{strided_block_forward.2} parent=43 // pred_check
        %p568 = pneg %p134
      $region50: #{strided_block_forward.2} parent=43 // pred_check_branch
        %570 = sbr.rel (%p568) target = $region52
      $region51: #{strided_block_forward.2} parent=43 // pred_region
        %p571 = scmp.lt.s32.totalorder %s17, 1
        %s572 = scalar_select %p571, %s17, 1
        %s573 = smul.addr %s572, 2
        %s574 = scalar_lea.vmem %s4, %s573
      $region52: #{strided_block_forward.2} parent=43 // pred_fallthru
        _
    $region44: #{strided_block_forward.2} parent=5 // pred_fallthru
      _
  $region6: #{strided_block_forward.2} parent=0 // loop_footer
    %s15 = sadd.s32 1, %s11
  $region7: #{strided_block_forward.2} parent=0 // loop_footer_branch
    %10 = sbr.rel target = $region3
  $region8: #{strided_block_forward.2} parent=0 // loop_exit
    _

// kernel: tile.38
$region0: #{tile.38}
  #allocation0 [shape = 's32[1]{0}', space=sflag, size = 0x4, scoped, tag = 'scoped memory for tile.38']
  %s0 = inlined_call_operand.vmem [shape: f32[8], index: 0, kind: input, shape index: {}]
  %s1 = inlined_call_operand.vmem [shape: f32[8,8], index: 1, kind: output, shape index: {}]
  // Predicated region
  $region2: #{tile.38} parent=0 // pred_check
    _
  $region3: #{tile.38} parent=0 // pred_check_branch
    %3 = sbr.rel (0) target = $region5
  $region4: #{tile.38} parent=0 // pred_region
    _
  $region5: #{tile.38} parent=0 // pred_fallthru
    _
  %v4 = vld [vmem:[%s0] ss:$0 sm:$0xff]
  %5 = vst [vmem:[%s1] sm:$0xff] %v4

// kernel: tile.39
$region0: #{tile.39}
  %s0 = inlined_call_operand.vmem [shape: f32[8,8], index: 0, kind: input, shape index: {}]
  %s1 = inlined_call_operand.vmem [shape: f32[1,64], index: 1, kind: output, shape index: {}]
  $region1: #{tile.39} parent=0
    #allocation0 [shape = 'u8[4096]{0}', space=vmem, size = 0x1000, scoped, tag = 'scoped mem for output reshape']
    %v2 = vld [vmem:[%s0] sm:$0x1]
    %vm3 = vcmask 64512
    %4 = vst.msk [vmem:[#allocation0] sm:$0x1] %vm3, %v2
    %s5 = scalar_lea.vmem %s0, 7
    %v6 = vld [vmem:[%s5] sm:$0x1]
    %7 = vrot.lane.b32.xlu0 %v6, 56
    %v8 = vpop.permute.xlu0 %7
    %vm9 = vcmask 523712
    %10 = vst.msk [vmem:[#allocation0] sm:$0x1] %vm9, %v8
    %s11 = scalar_lea.vmem %s0, 6
    %v12 = vld [vmem:[%s11] sm:$0x1]
    %13 = vrot.lane.b32.xlu0 %v12, 48
    %v14 = vpop.permute.xlu0 %13
    %vm15 = vcmask 458112
    %16 = vst.msk [vmem:[#allocation0] sm:$0x1] %vm15, %v14
    %s17 = scalar_lea.vmem %s0, 5
    %v18 = vld [vmem:[%s17] sm:$0x1]
    %19 = vrot.lane.b32.xlu0 %v18, 40
    %v20 = vpop.permute.xlu0 %19
    %vm21 = vcmask 392512
    %22 = vst.msk [vmem:[#allocation0] sm:$0x1] %vm21, %v20
    %s23 = scalar_lea.vmem %s0, 4
    %v24 = vld [vmem:[%s23] sm:$0x1]
    %25 = vrot.lane.b32.xlu0 %v24, 32
    %v26 = vpop.permute.xlu0 %25
    %vm27 = vcmask 326912
    %28 = vst.msk [vmem:[#allocation0] sm:$0x1] %vm27, %v26
    %s29 = scalar_lea.vmem %s0, 3
    %v30 = vld [vmem:[%s29] sm:$0x1]
    %31 = vrot.lane.b32.xlu0 %v30, 24
    %v32 = vpop.permute.xlu0 %31
    %vm33 = vcmask 261312
    %34 = vst.msk [vmem:[#allocation0] sm:$0x1] %vm33, %v32
    %s35 = scalar_lea.vmem %s0, 2
    %v36 = vld [vmem:[%s35] sm:$0x1]
    %37 = vrot.lane.b32.xlu0 %v36, 16
    %v38 = vpop.permute.xlu0 %37
    %vm39 = vcmask 195712
    %40 = vst.msk [vmem:[#allocation0] sm:$0x1] %vm39, %v38
    %s41 = scalar_lea.vmem %s0, 1
    %v42 = vld [vmem:[%s41] sm:$0x1]
    %43 = vrot.lane.b32.xlu0 %v42, 8
    %v44 = vpop.permute.xlu0 %43
    %vm45 = vcmask 130112
    %46 = vst.msk [vmem:[#allocation0] sm:$0x1] %vm45, %v44
    %s48 = sshllo.u32 0, 1
    %v50 = vld [vmem:[#allocation0] sm:%s48]
    %s51 = sshllo.u32 0, 1
    %52 = vst [vmem:[%s1] sm:%s51] %v50

// kernel: strided_block_forward.3
$region0: #{strided_block_forward.3}
  #allocation0 [shape = 'u32[]', space=smem, size = 0x4, offset = 0x4, fixed_abs, tag = 'smem constant byte address 0x4 - core index']
  #allocation1 [shape = 'u32[144,128]{1,0:T(1,128)}', space=vmem, size = 0x12000, scoped, tag = 'internal scratch']
  %s0 = inlined_call_operand.vmem [shape: bf16[2,9,288], index: 0, kind: input, shape index: {}]
  %s1 = inlined_call_operand.vmem [shape: bf16[2,288,64], index: 1, kind: input, shape index: {}]
  %s2 = inlined_call_operand.vmem [shape: f32[1,64], index: 2, kind: input, shape index: {}]
  %s3 = inlined_call_operand.vmem [shape: f32[2,8,64], index: 3, kind: output, shape index: {0}]
  %s4 = inlined_call_operand.vmem [shape: f32[2,2,64], index: 4, kind: output, shape index: {1}]
  %5 = xla_tuple %s3, %s4
  %s6 = sld [smem:[#allocation0]]
  $region53: #{strided_block_forward.3} parent=0
    _
  %s8 = ssub.s32 1, %s6
  %s9 = scalar_select 0, %s8, %s6
  loop: start=0, step=1, limit=4
  $region2: #{strided_block_forward.3} parent=0 // loop_pre_header
    _
  $region3: #{strided_block_forward.3} parent=0 // loop_header
    %s11 = sphi 0, %s15
    %p12 = scmp.ge.s32.totalorder %s11, 4
    %s21 = sphi 0, %s23
    %s24 = sphi 0, %s21
    %s25 = sphi 0, %s24
    %s41 = sphi 0, %s25
    %s45 = sphi 0, %s45
    %s47 = sphi 0, %s45
    %s48 = sphi 0, %s47
    %s62 = sphi 0, %s48
    %s66 = sphi 0, %s66
    %s68 = sphi 0, %s66
    %s69 = sphi 0, %s68
    %s83 = sphi 0, %s69
    %s89 = sphi 0, %s91
    %s92 = sphi 0, %s89
    %s93 = sphi 0, %s92
    %s109 = sphi 0, %s93
    %s115 = sphi 0, %s117
    %s118 = sphi 0, %s115
    %s119 = sphi 0, %s118
    %s135 = sphi 0, %s119
  $region4: #{strided_block_forward.3} parent=0 // loop_header_branch
    %14 = sbr.rel (%p12) target = $region8
  $region5: #{strided_block_forward.3} parent=0 // loop_body
    %s16 = ssub.s32 %s11, 1
    %s17 = ssub.s32 %s11, 2
    %s18 = sadd.s32 %s11, 1
    %s19 = ssub.s32 %s11, %s18
    %p20 = scmp.eq.s32.totalorder %s19, 0
    %s22 = sadd.s32 %s21, 1
    %s23 = scalar_select %p20, %s21, %s22
    %p26 = pneg %p20
    %p27 = scmp.eq.s32.totalorder %s11, 1
    %p28 = por %p26, %p27
    %p29 = scmp.ne.s32.totalorder %s21, %s24
    %p30 = scmp.eq.s32.totalorder %s11, 0
    %p31 = por %p29, %p30
    %p32 = scmp.ne.s32.totalorder %s21, %s24
    %p33 = scmp.eq.s32.totalorder %s16, 1
    %p34 = por %p32, %p33
    %p35 = scmp.ne.s32.totalorder %s24, %s25
    %p36 = scmp.eq.s32.totalorder %s16, 0
    %p37 = por %p35, %p36
    %p38 = scmp.ne.s32.totalorder %s24, %s25
    %p39 = scmp.eq.s32.totalorder %s17, 1
    %p40 = por %p38, %p39
    %p42 = scmp.ne.s32.totalorder %s25, %s41
    %p43 = scmp.eq.s32.totalorder %s17, 0
    %p44 = por %p42, %p43
    %s46 = sadd.s32 %s45, 1
    %p49 = scmp.eq.s32.totalorder %s11, 1
    %p50 = scmp.ne.s32.totalorder %s45, %s47
    %p51 = scmp.eq.s32.totalorder %s11, 0
    %p52 = por %p50, %p51
    %p53 = scmp.ne.s32.totalorder %s45, %s47
    %p54 = scmp.eq.s32.totalorder %s16, 1
    %p55 = por %p53, %p54
    %p56 = scmp.ne.s32.totalorder %s47, %s48
    %p57 = scmp.eq.s32.totalorder %s16, 0
    %p58 = por %p56, %p57
    %p59 = scmp.ne.s32.totalorder %s47, %s48
    %p60 = scmp.eq.s32.totalorder %s17, 1
    %p61 = por %p59, %p60
    %p63 = scmp.ne.s32.totalorder %s48, %s62
    %p64 = scmp.eq.s32.totalorder %s17, 0
    %p65 = por %p63, %p64
    %s67 = sadd.s32 %s66, 1
    %p70 = scmp.eq.s32.totalorder %s11, 1
    %p71 = scmp.ne.s32.totalorder %s66, %s68
    %p72 = scmp.eq.s32.totalorder %s11, 0
    %p73 = por %p71, %p72
    %p74 = scmp.ne.s32.totalorder %s66, %s68
    %p75 = scmp.eq.s32.totalorder %s16, 1
    %p76 = por %p74, %p75
    %p77 = scmp.ne.s32.totalorder %s68, %s69
    %p78 = scmp.eq.s32.totalorder %s16, 0
    %p79 = por %p77, %p78
    %p80 = scmp.ne.s32.totalorder %s68, %s69
    %p81 = scmp.eq.s32.totalorder %s17, 1
    %p82 = por %p80, %p81
    %p84 = scmp.ne.s32.totalorder %s69, %s83
    %p85 = scmp.eq.s32.totalorder %s17, 0
    %p86 = por %p84, %p85
    %s87 = ssub.s32 %s11, %s18
    %p88 = scmp.eq.s32.totalorder %s87, 0
    %s90 = sadd.s32 %s89, 1
    %s91 = scalar_select %p88, %s89, %s90
    %p94 = pneg %p88
    %p95 = scmp.eq.s32.totalorder %s11, 1
    %p96 = por %p94, %p95
    %p97 = scmp.ne.s32.totalorder %s89, %s92
    %p98 = scmp.eq.s32.totalorder %s11, 0
    %p99 = por %p97, %p98
    %p100 = scmp.ne.s32.totalorder %s89, %s92
    %p101 = scmp.eq.s32.totalorder %s16, 1
    %p102 = por %p100, %p101
    %p103 = scmp.ne.s32.totalorder %s92, %s93
    %p104 = scmp.eq.s32.totalorder %s16, 0
    %p105 = por %p103, %p104
    %p106 = scmp.ne.s32.totalorder %s92, %s93
    %p107 = scmp.eq.s32.totalorder %s17, 1
    %p108 = por %p106, %p107
    %p110 = scmp.ne.s32.totalorder %s93, %s109
    %p111 = scmp.eq.s32.totalorder %s17, 0
    %p112 = por %p110, %p111
    %s113 = ssub.s32 %s11, %s18
    %p114 = scmp.eq.s32.totalorder %s113, 0
    %s116 = sadd.s32 %s115, 1
    %s117 = scalar_select %p114, %s115, %s116
    %p120 = pneg %p114
    %p121 = scmp.eq.s32.totalorder %s11, 1
    %p122 = por %p120, %p121
    %p123 = scmp.ne.s32.totalorder %s115, %s118
    %p124 = scmp.eq.s32.totalorder %s11, 0
    %p125 = por %p123, %p124
    %p126 = scmp.ne.s32.totalorder %s115, %s118
    %p127 = scmp.eq.s32.totalorder %s16, 1
    %p128 = por %p126, %p127
    %p129 = scmp.ne.s32.totalorder %s118, %s119
    %p130 = scmp.eq.s32.totalorder %s16, 0
    %p131 = por %p129, %p130
    %p132 = scmp.ne.s32.totalorder %s118, %s119
    %p133 = scmp.eq.s32.totalorder %s17, 1
    %p134 = por %p132, %p133
    %p136 = scmp.ne.s32.totalorder %s119, %s135
    %p137 = scmp.eq.s32.totalorder %s17, 0
    %p138 = por %p136, %p137
    %p139 = scmp.le.s32.totalorder 1, %s11
    %p140 = scmp.lt.s32.totalorder %s11, 3
    %p141 = pnand %p139, %p140
    %p142 = pneg %p141
    // Predicated region
    $region9: #{strided_block_forward.3} parent=5 // pred_check
      _
    $region10: #{strided_block_forward.3} parent=5 // pred_check_branch
      %144 = sbr.rel (%p141) target = $region12
    $region11: #{strided_block_forward.3} parent=5 // pred_region
      %s145 = ssub.s32 %s11, 1
      // Predicated region
      $region13: #{strided_block_forward.3} parent=11 // pred_check
        %p146 = pneg %p58
      $region14: #{strided_block_forward.3} parent=11 // pred_check_branch
        %148 = sbr.rel (%p146) target = $region16
      $region15: #{strided_block_forward.3} parent=11 // pred_region
        _
      $region16: #{strided_block_forward.3} parent=11 // pred_fallthru
        _
      // Predicated region
      $region17: #{strided_block_forward.3} parent=11 // pred_check
        %p149 = pneg %p79
      $region18: #{strided_block_forward.3} parent=11 // pred_check_branch
        %151 = sbr.rel (%p149) target = $region20
      $region19: #{strided_block_forward.3} parent=11 // pred_region
        _
      $region20: #{strided_block_forward.3} parent=11 // pred_fallthru
        _
    $region12: #{strided_block_forward.3} parent=5 // pred_fallthru
      _
    %p152 = scmp.lt.s32.totalorder %s11, 2
    // Predicated region
    $region21: #{strided_block_forward.3} parent=5 // pred_check
      %p153 = pneg %p152
    $region22: #{strided_block_forward.3} parent=5 // pred_check_branch
      %155 = sbr.rel (%p153) target = $region24
    $region23: #{strided_block_forward.3} parent=5 // pred_region
      // Predicated region
      $region25: #{strided_block_forward.3} parent=23 // pred_check
        %p156 = pneg %p31
      $region26: #{strided_block_forward.3} parent=23 // pred_check_branch
        %158 = sbr.rel (%p156) target = $region28
      $region27: #{strided_block_forward.3} parent=23 // pred_region
        %p159 = scmp.lt.s32.totalorder %s11, 1
        %s160 = scalar_select %p159, %s11, 1
        %s161 = smul.addr %s160, 6
        %s162 = smul.addr %s161, 4
        %s163 = scalar_lea.vmem %s0, %s162
      $region28: #{strided_block_forward.3} parent=23 // pred_fallthru
        _
    $region24: #{strided_block_forward.3} parent=5 // pred_fallthru
      _
    %p164 = scmp.le.s32.totalorder 1, %s11
    %p165 = scmp.lt.s32.totalorder %s11, 3
    %p166 = pnand %p164, %p165
    %p167 = pneg %p166
    // Predicated region
    $region29: #{strided_block_forward.3} parent=5 // pred_check
      _
    $region30: #{strided_block_forward.3} parent=5 // pred_check_branch
      %169 = sbr.rel (%p166) target = $region32
    $region31: #{strided_block_forward.3} parent=5 // pred_region
      %s170 = ssub.s32 %s11, 1
      %p171 = scmp.lt.s32.totalorder %s16, 1
      %s172 = scalar_select %p171, %s16, 1
      %s173 = smul.addr %s172, 6
      %s174 = smul.addr %s173, 4
      %s175 = scalar_lea.vmem %s0, %s174
      %p176 = pneg %p37
      %p177 = pneg %p34
      %p178 = pneg %p58
      %p179 = pneg %p55
      %p180 = pneg %p79
      %p181 = pneg %p76
      %p182 = pneg %p105
      %p183 = pneg %p102
      %p184 = scmp.lt.s32.totalorder %s16, 1
      %s185 = scalar_select %p184, %s16, 1
      %s186 = smul.addr %s185, 8
      %s187 = scalar_lea.vmem %s3, %s186
      %p188 = pneg %p131
      %p189 = pneg %p128
      %p190 = scmp.lt.s32.totalorder %s16, 1
      %s191 = scalar_select %p190, %s16, 1
      %s192 = smul.addr %s191, 2
      %s193 = scalar_lea.vmem %s4, %s192
      %p194 = scmp.lt.s32.totalorder %s16, 1
      %s195 = scalar_select %p194, %s16, 1
      %s196 = smul.addr %s195, 6
      %s197 = smul.addr %s196, 4
      %s198 = scalar_lea.vmem %s0, %s197
      %p199 = scmp.lt.s32.totalorder %s16, 1
      %s200 = scalar_select %p199, %s16, 1
      %s201 = smul.addr %s200, 8
      %s202 = scalar_lea.vmem %s3, %s201
      %p203 = scmp.lt.s32.totalorder %s16, 1
      %s204 = scalar_select %p203, %s16, 1
      %s205 = smul.addr %s204, 2
      %s206 = scalar_lea.vmem %s4, %s205
      %v208 = vld [vmem:[%s198] sm:$0xff]
      %v209 = vld [vmem:[%s198 + $0x8] sm:$0xf]
      %v210 = vld [vmem:[%s1] sm:$0xf]
      %v211 = vld [vmem:[%s1 + $0x4] sm:$0xf]
      %v212 = vld [vmem:[%s1 + $0x8] sm:$0xf]
      %v213 = vld [vmem:[%s1 + $0xc] sm:$0xf]
      %v214 = vld [vmem:[%s1 + $0x10] sm:$0xf]
      %v215 = vld [vmem:[%s1 + $0x14] sm:$0xf]
      %v216 = vld [vmem:[%s1 + $0x18] sm:$0xf]
      %v217 = vld [vmem:[%s1 + $0x1c] sm:$0xf]
      %v218 = vld [vmem:[%s1 + $0x20] sm:$0xf]
      %v219 = vld [vmem:[%s1 + $0x24] sm:$0xf]
      %v220 = vld [vmem:[%s1 + $0x28] sm:$0xf]
      %v221 = vld [vmem:[%s1 + $0x2c] sm:$0xf]
      %v222 = vld [vmem:[%s1 + $0x30] sm:$0xf]
      %v223 = vld [vmem:[%s1 + $0x34] sm:$0xf]
      %v224 = vld [vmem:[%s1 + $0x38] sm:$0xf]
      %v225 = vld [vmem:[%s1 + $0x3c] sm:$0xf]
      %v226 = vld [vmem:[%s1 + $0x40] sm:$0xf]
      %v227 = vld [vmem:[%s1 + $0x44] sm:$0xf]
      %v228 = vld [vmem:[%s1 + $0x48] sm:$0xf]
      %v229 = vld [vmem:[%s1 + $0x4c] sm:$0xf]
      %v230 = vld [vmem:[%s1 + $0x50] sm:$0xf]
      %v231 = vld [vmem:[%s1 + $0x54] sm:$0xf]
      %v232 = vld [vmem:[%s1 + $0x58] sm:$0xf]
      %v233 = vld [vmem:[%s1 + $0x5c] sm:$0xf]
      %v234 = vld [vmem:[%s1 + $0x60] sm:$0xf]
      %v235 = vld [vmem:[%s1 + $0x64] sm:$0xf]
      %v236 = vld [vmem:[%s1 + $0x68] sm:$0xf]
      %v237 = vld [vmem:[%s1 + $0x6c] sm:$0xf]
      %v238 = vld [vmem:[%s1 + $0x70] sm:$0xf]
      %v239 = vld [vmem:[%s1 + $0x74] sm:$0xf]
      %v240 = vld [vmem:[%s1 + $0x78] sm:$0xf]
      %v241 = vld [vmem:[%s1 + $0x7c] sm:$0xf]
      %v242 = vld [vmem:[%s1 + $0x80] sm:$0xf]
      %v243 = vld [vmem:[%s1 + $0x84] sm:$0xf]
      %v244 = vld [vmem:[%s1 + $0x88] sm:$0xf]
      %v245 = vld [vmem:[%s1 + $0x8c] sm:$0xf]
      %v246 = vld [vmem:[%s198 + $0xc] sm:$0x11]
      %v247 = vld [vmem:[%s198 + $0x14] sm:$0x1]
      %s248 = scalar_lea.vmem %s1, 144
      %v249 = vld [vmem:[%s248] sm:$0xf]
      %v250 = vld [vmem:[%s248 + $0x4] sm:$0xf]
      %v251 = vld [vmem:[%s248 + $0x8] sm:$0xf]
      %v252 = vld [vmem:[%s248 + $0xc] sm:$0xf]
      %v253 = vld [vmem:[%s248 + $0x10] sm:$0xf]
      %v254 = vld [vmem:[%s248 + $0x14] sm:$0xf]
      %v255 = vld [vmem:[%s248 + $0x18] sm:$0xf]
      %v256 = vld [vmem:[%s248 + $0x1c] sm:$0xf]
      %v257 = vld [vmem:[%s248 + $0x20] sm:$0xf]
      %v258 = vld [vmem:[%s248 + $0x24] sm:$0xf]
      %v259 = vld [vmem:[%s248 + $0x28] sm:$0xf]
      %v260 = vld [vmem:[%s248 + $0x2c] sm:$0xf]
      %v261 = vld [vmem:[%s248 + $0x30] sm:$0xf]
      %v262 = vld [vmem:[%s248 + $0x34] sm:$0xf]
      %v263 = vld [vmem:[%s248 + $0x38] sm:$0xf]
      %v264 = vld [vmem:[%s248 + $0x3c] sm:$0xf]
      %v265 = vld [vmem:[%s248 + $0x40] sm:$0xf]
      %v266 = vld [vmem:[%s248 + $0x44] sm:$0xf]
      %v267 = vld [vmem:[%s248 + $0x48] sm:$0xf]
      %v268 = vld [vmem:[%s248 + $0x4c] sm:$0xf]
      %v269 = vld [vmem:[%s248 + $0x50] sm:$0xf]
      %v270 = vld [vmem:[%s248 + $0x54] sm:$0xf]
      %v271 = vld [vmem:[%s248 + $0x58] sm:$0xf]
      %v272 = vld [vmem:[%s248 + $0x5c] sm:$0xf]
      %v273 = vld [vmem:[%s248 + $0x60] sm:$0xf]
      %v274 = vld [vmem:[%s248 + $0x64] sm:$0xf]
      %v275 = vld [vmem:[%s248 + $0x68] sm:$0xf]
      %v276 = vld [vmem:[%s248 + $0x6c] sm:$0xf]
      %v277 = vld [vmem:[%s248 + $0x70] sm:$0xf]
      %v278 = vld [vmem:[%s248 + $0x74] sm:$0xf]
      %v279 = vld [vmem:[%s248 + $0x78] sm:$0xf]
      %v280 = vld [vmem:[%s248 + $0x7c] sm:$0xf]
      %v281 = vld [vmem:[%s248 + $0x80] sm:$0xf]
      %v282 = vld [vmem:[%s248 + $0x84] sm:$0xf]
      %v283 = vld [vmem:[%s248 + $0x88] sm:$0xf]
      %v284 = vld [vmem:[%s248 + $0x8c] sm:$0xf]
      %v289 = vunpack.c.l.b16 %v208
      %v290 = vunpack.c.h.b16 %v208
      %v291 = vunpack.c.l.b16 %v209
      %v292 = vunpack.c.l.b16 %v246
      %v293 = vunpack.c.h.b16 %v246
      %v294 = vunpack.c.l.b16 %v247
      %v295 = vpack.c.b16 %v292, %v289
      %v296 = vpack.c.b16 %v293, %v290
      %v297 = vpack.c.b16 %v294, %v291
      %v299 = vshrl.u32 %v295, 16
      %v301 = vshll.u32 %v295, 16
      %v303 = vrot.slane %v301, 1
      %v304 = vor.u32 %v299, %v303
      %v306 = vshrl.u32 %v296, 16
      %v308 = vshll.u32 %v296, 16
      %v310 = vrot.slane %v308, 1
      %v311 = vor.u32 %v306, %v310
      %v313 = vshrl.u32 %v297, 16
      %v315 = vshll.u32 %v297, 16
      %v317 = vrot.slane %v315, 1
      %v318 = vor.u32 %v313, %v317
      %v357 = vunpack.c.l.b16 %v249
      %v358 = vunpack.c.l.b16 %v250
      %v359 = vunpack.c.l.b16 %v251
      %v360 = vunpack.c.l.b16 %v252
      %v361 = vunpack.c.l.b16 %v253
      %v362 = vunpack.c.l.b16 %v254
      %v363 = vunpack.c.l.b16 %v255
      %v364 = vunpack.c.l.b16 %v256
      %v365 = vunpack.c.l.b16 %v257
      %v366 = vunpack.c.l.b16 %v258
      %v367 = vunpack.c.l.b16 %v259
      %v368 = vunpack.c.l.b16 %v260
      %v369 = vunpack.c.l.b16 %v261
      %v370 = vunpack.c.l.b16 %v262
      %v371 = vunpack.c.l.b16 %v263
      %v372 = vunpack.c.l.b16 %v264
      %v373 = vunpack.c.l.b16 %v265
      %v374 = vunpack.c.l.b16 %v266
      %v375 = vunpack.c.l.b16 %v267
      %v376 = vunpack.c.l.b16 %v268
      %v377 = vunpack.c.l.b16 %v269
      %v378 = vunpack.c.l.b16 %v270
      %v379 = vunpack.c.l.b16 %v271
      %v380 = vunpack.c.l.b16 %v272
      %v381 = vunpack.c.l.b16 %v273
      %v382 = vunpack.c.l.b16 %v274
      %v383 = vunpack.c.l.b16 %v275
      %v384 = vunpack.c.l.b16 %v276
      %v385 = vunpack.c.l.b16 %v277
      %v386 = vunpack.c.l.b16 %v278
      %v387 = vunpack.c.l.b16 %v279
      %v388 = vunpack.c.l.b16 %v280
      %v389 = vunpack.c.l.b16 %v281
      %v390 = vunpack.c.l.b16 %v282
      %v391 = vunpack.c.l.b16 %v283
      %v392 = vunpack.c.l.b16 %v284
      %v393 = vpack.c.b16 %v358, %v357
      %v394 = vpack.c.b16 %v360, %v359
      %v395 = vpack.c.b16 %v362, %v361
      %v396 = vpack.c.b16 %v364, %v363
      %v397 = vpack.c.b16 %v366, %v365
      %v398 = vpack.c.b16 %v368, %v367
      %v399 = vpack.c.b16 %v370, %v369
      %v400 = vpack.c.b16 %v372, %v371
      %v401 = vpack.c.b16 %v374, %v373
      %v402 = vpack.c.b16 %v376, %v375
      %v403 = vpack.c.b16 %v378, %v377
      %v404 = vpack.c.b16 %v380, %v379
      %v405 = vpack.c.b16 %v382, %v381
      %v406 = vpack.c.b16 %v384, %v383
      %v407 = vpack.c.b16 %v386, %v385
      %v408 = vpack.c.b16 %v388, %v387
      %v409 = vpack.c.b16 %v390, %v389
      %v410 = vpack.c.b16 %v392, %v391
      %vm429 = vcmask 261120
      %v431 = vsel %vm429, %v318, 0
      %433 = vmatprep.subr.bf16.mxu0 0
      %434 = vmatpush1.bf16.msra.mxu0 %v393
      %435 = vmatprep.subr.bf16.mxu0 0
      %436 = vmatpush1.bf16.msra.mxu0 %v394
      %437 = vmatprep.subr.bf16.mxu0 0
      %438 = vmatpush1.bf16.msra.mxu0 %v395
      %439 = vmatprep.subr.bf16.mxu0 0
      %440 = vmatpush1.bf16.msra.mxu0 %v396
      %441 = vmatprep.subr.bf16.mxu0 0
      %442 = vmatpush1.bf16.msra.mxu0 %v397
      %443 = vmatprep.subr.bf16.mxu0 0
      %444 = vmatpush1.bf16.msra.mxu0 %v398
      %445 = vmatprep.subr.bf16.mxu0 0
      %446 = vmatpush1.bf16.msra.mxu0 %v399
      %447 = vmatprep.subr.bf16.mxu0 0
      %448 = vmatpush1.bf16.msra.mxu0 %v400
      %449 = vmatprep.subr.bf16.mxu0 0
      %450 = vmatpush1.bf16.msra.mxu0 %v401
      %451 = vmatprep.subr.bf16.mxu0 0
      %452 = vmatpush1.bf16.msra.mxu0 %v402
      %453 = vmatprep.subr.bf16.mxu0 0
      %454 = vmatpush1.bf16.msra.mxu0 %v403
      %455 = vmatprep.subr.bf16.mxu0 0
      %456 = vmatpush1.bf16.msra.mxu0 %v404
      %457 = vmatprep.subr.bf16.mxu0 0
      %458 = vmatpush1.bf16.msra.mxu0 %v405
      %459 = vmatprep.subr.bf16.mxu0 0
      %460 = vmatpush1.bf16.msra.mxu0 %v406
      %461 = vmatprep.subr.bf16.mxu0 0
      %462 = vmatpush1.bf16.msra.mxu0 %v407
      %463 = vmatprep.subr.bf16.mxu0 0
      %464 = vmatpush1.bf16.msra.mxu0 %v408
      %465 = vmatprep.mubr.bf16.mxu0 %v311
      %466 = vmatmul.mubr.bf16.gmra.mrb[0].mxu0 %v304
      %v467 = vpop.f32.mrb[0].mxu0
      %v468 = vadd.f32 0.0, %v467
      %v469 = vpop.f32.mrb[0].mxu0
      %v470 = vpop.f32.mrb[0].mxu0
      %v471 = vpop.f32.mrb[0].mxu0
      %472 = vdwg.mxu0
      %473 = vmatprep.subr.bf16.mxu0 0
      %474 = vmatpush1.bf16.msra.mxu0 %v409
      %475 = vmatprep.subr.bf16.mxu0 0
      %476 = vmatpush1.bf16.msra.mxu0 %v410
      %477 = vmatprep.subr.bf16.mxu0 0
      %478 = vmatpush1.bf16.msra.mxu0 0
      %479 = vmatprep.subr.bf16.mxu0 0
      %480 = vmatpush1.bf16.msra.mxu0 0
      %481 = vmatprep.subr.bf16.mxu0 0
      %482 = vmatpush1.bf16.msra.mxu0 0
      %483 = vmatprep.subr.bf16.mxu0 0
      %484 = vmatpush1.bf16.msra.mxu0 0
      %485 = vmatprep.subr.bf16.mxu0 0
      %486 = vmatpush1.bf16.msra.mxu0 0
      %487 = vmatprep.subr.bf16.mxu0 0
      %488 = vmatpush1.bf16.msra.mxu0 0
      %489 = vmatprep.subr.bf16.mxu0 0
      %490 = vmatpush1.bf16.msra.mxu0 0
      %491 = vmatprep.subr.bf16.mxu0 0
      %492 = vmatpush1.bf16.msra.mxu0 0
      %493 = vmatprep.subr.bf16.mxu0 0
      %494 = vmatpush1.bf16.msra.mxu0 0
      %495 = vmatprep.subr.bf16.mxu0 0
      %496 = vmatpush1.bf16.msra.mxu0 0
      %497 = vmatprep.subr.bf16.mxu0 0
      %498 = vmatpush1.bf16.msra.mxu0 0
      %499 = vmatprep.subr.bf16.mxu0 0
      %500 = vmatpush1.bf16.msra.mxu0 0
      %501 = vmatprep.subr.bf16.mxu0 0
      %502 = vmatpush1.bf16.msra.mxu0 0
      %503 = vmatprep.subr.bf16.mxu0 0
      %504 = vmatpush1.bf16.msra.mxu0 0
      %505 = vmatprep.mubr.bf16.mxu0 0
      %506 = vmatmul.mubr.bf16.gmra.mrb[0].mxu0 %v431
      %v507 = vpop.f32.mrb[0].mxu0
      %v508 = vadd.f32 %v468, %v507
      %v509 = vpop.f32.mrb[0].mxu0
      %v510 = vpop.f32.mrb[0].mxu0
      %v511 = vpop.f32.mrb[0].mxu0
      %512 = vdwg.mxu0
      %v513 = vpack.c.b16 %v289, %v289
      %v514 = vpack.c.b16 %v290, %v290
      %v515 = vpack.c.b16 %v291, %v291
      %v554 = vunpack.c.l.b16 %v210
      %v555 = vunpack.c.l.b16 %v211
      %v556 = vunpack.c.l.b16 %v212
      %v557 = vunpack.c.l.b16 %v213
      %v558 = vunpack.c.l.b16 %v214
      %v559 = vunpack.c.l.b16 %v215
      %v560 = vunpack.c.l.b16 %v216
      %v561 = vunpack.c.l.b16 %v217
      %v562 = vunpack.c.l.b16 %v218
      %v563 = vunpack.c.l.b16 %v219
      %v564 = vunpack.c.l.b16 %v220
      %v565 = vunpack.c.l.b16 %v221
      %v566 = vunpack.c.l.b16 %v222
      %v567 = vunpack.c.l.b16 %v223
      %v568 = vunpack.c.l.b16 %v224
      %v569 = vunpack.c.l.b16 %v225
      %v570 = vunpack.c.l.b16 %v226
      %v571 = vunpack.c.l.b16 %v227
      %v572 = vunpack.c.l.b16 %v228
      %v573 = vunpack.c.l.b16 %v229
      %v574 = vunpack.c.l.b16 %v230
      %v575 = vunpack.c.l.b16 %v231
      %v576 = vunpack.c.l.b16 %v232
      %v577 = vunpack.c.l.b16 %v233
      %v578 = vunpack.c.l.b16 %v234
      %v579 = vunpack.c.l.b16 %v235
      %v580 = vunpack.c.l.b16 %v236
      %v581 = vunpack.c.l.b16 %v237
      %v582 = vunpack.c.l.b16 %v238
      %v583 = vunpack.c.l.b16 %v239
      %v584 = vunpack.c.l.b16 %v240
      %v585 = vunpack.c.l.b16 %v241
      %v586 = vunpack.c.l.b16 %v242
      %v587 = vunpack.c.l.b16 %v243
      %v588 = vunpack.c.l.b16 %v244
      %v589 = vunpack.c.l.b16 %v245
      %v590 = vpack.c.b16 %v555, %v554
      %v591 = vpack.c.b16 %v557, %v556
      %v592 = vpack.c.b16 %v559, %v558
      %v593 = vpack.c.b16 %v561, %v560
      %v594 = vpack.c.b16 %v563, %v562
      %v595 = vpack.c.b16 %v565, %v564
      %v596 = vpack.c.b16 %v567, %v566
      %v597 = vpack.c.b16 %v569, %v568
      %v598 = vpack.c.b16 %v571, %v570
      %v599 = vpack.c.b16 %v573, %v572
      %v600 = vpack.c.b16 %v575, %v574
      %v601 = vpack.c.b16 %v577, %v576
      %v602 = vpack.c.b16 %v579, %v578
      %v603 = vpack.c.b16 %v581, %v580
      %v604 = vpack.c.b16 %v583, %v582
      %v605 = vpack.c.b16 %v585, %v584
      %v606 = vpack.c.b16 %v587, %v586
      %v607 = vpack.c.b16 %v589, %v588
      %v627 = vsel %vm429, %v515, 0
      %629 = vmatprep.subr.bf16.mxu0 0
      %630 = vmatpush1.bf16.msra.mxu0 %v590
      %631 = vmatprep.subr.bf16.mxu0 0
      %632 = vmatpush1.bf16.msra.mxu0 %v591
      %633 = vmatprep.subr.bf16.mxu0 0
      %634 = vmatpush1.bf16.msra.mxu0 %v592
      %635 = vmatprep.subr.bf16.mxu0 0
      %636 = vmatpush1.bf16.msra.mxu0 %v593
      %637 = vmatprep.subr.bf16.mxu0 0
      %638 = vmatpush1.bf16.msra.mxu0 %v594
      %639 = vmatprep.subr.bf16.mxu0 0
      %640 = vmatpush1.bf16.msra.mxu0 %v595
      %641 = vmatprep.subr.bf16.mxu0 0
      %642 = vmatpush1.bf16.msra.mxu0 %v596
      %643 = vmatprep.subr.bf16.mxu0 0
      %644 = vmatpush1.bf16.msra.mxu0 %v597
      %645 = vmatprep.subr.bf16.mxu0 0
      %646 = vmatpush1.bf16.msra.mxu0 %v598
      %647 = vmatprep.subr.bf16.mxu0 0
      %648 = vmatpush1.bf16.msra.mxu0 %v599
      %649 = vmatprep.subr.bf16.mxu0 0
      %650 = vmatpush1.bf16.msra.mxu0 %v600
      %651 = vmatprep.subr.bf16.mxu0 0
      %652 = vmatpush1.bf16.msra.mxu0 %v601
      %653 = vmatprep.subr.bf16.mxu0 0
      %654 = vmatpush1.bf16.msra.mxu0 %v602
      %655 = vmatprep.subr.bf16.mxu0 0
      %656 = vmatpush1.bf16.msra.mxu0 %v603
      %657 = vmatprep.subr.bf16.mxu0 0
      %658 = vmatpush1.bf16.msra.mxu0 %v604
      %659 = vmatprep.subr.bf16.mxu0 0
      %660 = vmatpush1.bf16.msra.mxu0 %v605
      %661 = vmatprep.mubr.bf16.mxu0 %v514
      %662 = vmatmul.mubr.bf16.gmra.mrb[0].mxu0 %v513
      %v663 = vpop.f32.mrb[0].mxu0
      %v664 = vadd.f32 %v508, %v663
      %v665 = vpop.f32.mrb[0].mxu0
      %v666 = vpop.f32.mrb[0].mxu0
      %v667 = vpop.f32.mrb[0].mxu0
      %668 = vdwg.mxu0
      %669 = vmatprep.subr.bf16.mxu0 0
      %670 = vmatpush1.bf16.msra.mxu0 %v606
      %671 = vmatprep.subr.bf16.mxu0 0
      %672 = vmatpush1.bf16.msra.mxu0 %v607
      %673 = vmatprep.subr.bf16.mxu0 0
      %674 = vmatpush1.bf16.msra.mxu0 0
      %675 = vmatprep.subr.bf16.mxu0 0
      %676 = vmatpush1.bf16.msra.mxu0 0
      %677 = vmatprep.subr.bf16.mxu0 0
      %678 = vmatpush1.bf16.msra.mxu0 0
      %679 = vmatprep.subr.bf16.mxu0 0
      %680 = vmatpush1.bf16.msra.mxu0 0
      %681 = vmatprep.subr.bf16.mxu0 0
      %682 = vmatpush1.bf16.msra.mxu0 0
      %683 = vmatprep.subr.bf16.mxu0 0
      %684 = vmatpush1.bf16.msra.mxu0 0
      %685 = vmatprep.subr.bf16.mxu0 0
      %686 = vmatpush1.bf16.msra.mxu0 0
      %687 = vmatprep.subr.bf16.mxu0 0
      %688 = vmatpush1.bf16.msra.mxu0 0
      %689 = vmatprep.subr.bf16.mxu0 0
      %690 = vmatpush1.bf16.msra.mxu0 0
      %691 = vmatprep.subr.bf16.mxu0 0
      %692 = vmatpush1.bf16.msra.mxu0 0
      %693 = vmatprep.subr.bf16.mxu0 0
      %694 = vmatpush1.bf16.msra.mxu0 0
      %695 = vmatprep.subr.bf16.mxu0 0
      %696 = vmatpush1.bf16.msra.mxu0 0
      %697 = vmatprep.subr.bf16.mxu0 0
      %698 = vmatpush1.bf16.msra.mxu0 0
      %699 = vmatprep.subr.bf16.mxu0 0
      %700 = vmatpush1.bf16.msra.mxu0 0
      %701 = vmatprep.mubr.bf16.mxu0 0
      %702 = vmatmul.mubr.bf16.gmra.mrb[0].mxu0 %v627
      %v703 = vpop.f32.mrb[0].mxu0
      %v704 = vadd.f32 %v664, %v703
      %v705 = vpop.f32.mrb[0].mxu0
      %v706 = vpop.f32.mrb[0].mxu0
      %v707 = vpop.f32.mrb[0].mxu0
      %708 = vdwg.mxu0
      %v709 = vld [vmem:[%s2] sm:$0x1]
      %v711 = vlaneseq
      %v712 = vshrl.u32 %v711, 7
      %v713 = vsub.s32 0, %v712
      %v714 = vrot.slane %v709, %v713
      %v716 = vadd.f32 %v704, %v714
      %vm717 = vcmp.ge.f32.partialorder %v716, 0.0
      %v718 = vmul.f32 %v716, 0.01
      %v719 = vsel %vm717, %v716, %v718
      %vm720 = vcmask 523264
      %721 = vst.msk [vmem:[%s202] sm:$0xff] %vm720, %v719
      %v722 = vsel %vm720, %v719, 0.0
      %v723 = vrot.slane %v722, 4
      %v724 = vadd.f32 %v722, %v723
      %v725 = vrot.slane %v724, 2
      %v726 = vadd.f32 %v724, %v725
      %v727 = vrot.slane %v726, 1
      %v728 = vadd.f32 %v726, %v727
      %v729 = vmul.f32 %v719, %v719
      %v730 = vsel %vm720, %v729, 0.0
      %v731 = vrot.slane %v730, 4
      %v732 = vadd.f32 %v730, %v731
      %v733 = vrot.slane %v732, 2
      %v734 = vadd.f32 %v732, %v733
      %v735 = vrot.slane %v734, 1
      %v736 = vadd.f32 %v734, %v735
      %vm737 = vcmask 1040384
      %v738 = vsel %vm737, %v728, %v736
      %vm739 = vcmask 517120
      %740 = vst.msk [vmem:[%s206] sm:$0x3] %vm739, %v738
      %p741 = scmp.lt.s32.totalorder %s16, 1
      %s742 = scalar_select %p741, %s16, 1
      %s743 = smul.addr %s742, 8
      %s744 = scalar_lea.vmem %s3, %s743
      %p745 = scmp.lt.s32.totalorder %s16, 1
      %s746 = scalar_select %p745, %s16, 1
      %s747 = smul.addr %s746, 2
      %s748 = scalar_lea.vmem %s4, %s747
      // Predicated region
      $region33: #{strided_block_forward.3} parent=31 // pred_check
        %p749 = pneg %p102
      $region34: #{strided_block_forward.3} parent=31 // pred_check_branch
        %751 = sbr.rel (%p749) target = $region36
      $region35: #{strided_block_forward.3} parent=31 // pred_region
        _
      $region36: #{strided_block_forward.3} parent=31 // pred_fallthru
        _
      // Predicated region
      $region37: #{strided_block_forward.3} parent=31 // pred_check
        %p752 = pneg %p128
      $region38: #{strided_block_forward.3} parent=31 // pred_check_branch
        %754 = sbr.rel (%p752) target = $region40
      $region39: #{strided_block_forward.3} parent=31 // pred_region
        _
      $region40: #{strided_block_forward.3} parent=31 // pred_fallthru
        _
    $region32: #{strided_block_forward.3} parent=5 // pred_fallthru
      _
    %p755 = scmp.le.s32.totalorder 2, %s11
    // Predicated region
    $region41: #{strided_block_forward.3} parent=5 // pred_check
      %p756 = pneg %p755
    $region42: #{strided_block_forward.3} parent=5 // pred_check_branch
      %758 = sbr.rel (%p756) target = $region44
    $region43: #{strided_block_forward.3} parent=5 // pred_region
      %s759 = ssub.s32 %s11, 2
      // Predicated region
      $region45: #{strided_block_forward.3} parent=43 // pred_check
        %p760 = pneg %p108
      $region46: #{strided_block_forward.3} parent=43 // pred_check_branch
        %762 = sbr.rel (%p760) target = $region48
      $region47: #{strided_block_forward.3} parent=43 // pred_region
        %p763 = scmp.lt.s32.totalorder %s17, 1
        %s764 = scalar_select %p763, %s17, 1
        %s765 = smul.addr %s764, 8
        %s766 = scalar_lea.vmem %s3, %s765
      $region48: #{strided_block_forward.3} parent=43 // pred_fallthru
        _
      // Predicated region
      $region49: #{strided_block_forward.3} parent=43 // pred_check
        %p767 = pneg %p134
      $region50: #{strided_block_forward.3} parent=43 // pred_check_branch
        %769 = sbr.rel (%p767) target = $region52
      $region51: #{strided_block_forward.3} parent=43 // pred_region
        %p770 = scmp.lt.s32.totalorder %s17, 1
        %s771 = scalar_select %p770, %s17, 1
        %s772 = smul.addr %s771, 2
        %s773 = scalar_lea.vmem %s4, %s772
      $region52: #{strided_block_forward.3} parent=43 // pred_fallthru
        _
    $region44: #{strided_block_forward.3} parent=5 // pred_fallthru
      _
  $region6: #{strided_block_forward.3} parent=0 // loop_footer
    %s15 = sadd.s32 1, %s11
  $region7: #{strided_block_forward.3} parent=0 // loop_footer_branch
    %10 = sbr.rel target = $region3
  $region8: #{strided_block_forward.3} parent=0 // loop_exit
    _

</llo_original>
